<compile_context>
chip_gen: v5e
topology: v5e:2x2
jax: 0.10.0
libtpu: 0.0.40
codegen_flags: <defaults>
</compile_context>

<pallas_src>
import jax
import jax.numpy as jnp
from jax import lax
from jax.experimental import pallas as pl
from jax.experimental.pallas import tpu as pltpu

K = 7          # conv kernel size
PAD = 3        # conv padding
SUB = 8        # sublane-aligned start of the valid interior in padded scratch
BN_EPS = 1e-5


def basic_block_kernel(x_ref, w1_ref, w2_ref, s1_ref, b1_ref, s2_ref, b2_ref,
                       o_ref, xpad, hpad):
    """One batch element per grid step.

    x_ref  : (1, L, Cp)       bf16 input (channels lane-padded to Cp)
    w1_ref : (K*Cp, Cp)       bf16 conv1 weights, im2col (tap-major) layout
    w2_ref : (K*Cp, Cp)       bf16 conv2 weights, im2col layout
    s1/b1  : (1, Cp)          f32 folded BN1 scale / shift
    s2/b2  : (1, Cp)          f32 folded BN2 scale / shift
    o_ref  : (1, L, Cp)       f32 output
    xpad   : VMEM (L+16, Cp)  bf16 scratch: zero-padded input, interior at row 8
    hpad   : VMEM (L+16, Cp)  bf16 scratch: zero-padded intermediate activation
    """
    L = o_ref.shape[1]
    Cp = o_ref.shape[2]

    # Zero only the boundary rows (aligned 8-row blocks); the interior is fully
    # overwritten every step.  Done per-step (cheap) so it is megacore-safe.
    edge = jnp.zeros((SUB, Cp), xpad.dtype)
    xpad[0:SUB, :] = edge
    xpad[SUB + L:SUB + L + SUB, :] = edge
    hpad[0:SUB, :] = edge
    hpad[SUB + L:SUB + L + SUB, :] = edge

    # Sublane-aligned interior store of the (unpadded) input.
    xpad[SUB:SUB + L, :] = x_ref[0]

    # ---- conv1: single (L, K*Cp) @ (K*Cp, Cp) MXU matmul (taps folded into
    #      the contracting dimension) ----
    lhs1 = jnp.concatenate(
        [xpad[SUB - PAD + k:SUB - PAD + k + L, :] for k in range(K)], axis=1)
    acc1 = jnp.dot(lhs1, w1_ref[...], preferred_element_type=jnp.float32)

    # ---- bn1 (folded) + relu ----
    h = jnp.maximum(acc1 * s1_ref[...] + b1_ref[...], 0.0)
    # TODO(synk): dropout(p=0.2) is identity in eval mode; training-mode RNG
    #             mask not implemented.

    # intermediate activation into padded scratch (bf16 for the next matmul)
    hpad[SUB:SUB + L, :] = h.astype(hpad.dtype)

    # ---- conv2: single im2col matmul ----
    lhs2 = jnp.concatenate(
        [hpad[SUB - PAD + k:SUB - PAD + k + L, :] for k in range(K)], axis=1)
    acc2 = jnp.dot(lhs2, w2_ref[...], preferred_element_type=jnp.float32)

    # ---- bn2 (folded) + residual add + relu (all f32) ----
    residual = x_ref[0].astype(jnp.float32)
    out = jnp.maximum(acc2 * s2_ref[...] + b2_ref[...] + residual, 0.0)
    o_ref[0] = out.astype(o_ref.dtype)


def _round_up(x, m):
    return ((x + m - 1) // m) * m


def _fold_bn(gamma, beta, mean, var, cpad):
    scale = gamma / jnp.sqrt(var + BN_EPS)
    shift = beta - mean * scale
    scale = jnp.pad(scale, (0, cpad - scale.shape[0]))
    shift = jnp.pad(shift, (0, cpad - shift.shape[0]))
    return (scale.reshape(1, cpad).astype(jnp.float32),
            shift.reshape(1, cpad).astype(jnp.float32))


def _im2col_weights(w_oik, cin_p, cout_p):
    """PyTorch (Cout, Cin, K) -> (K*Cin_p, Cout_p) bf16, tap-major rows."""
    cout, cin, k = w_oik.shape
    w = jnp.transpose(w_oik, (2, 1, 0))                        # (K, Cin, Cout)
    w = jnp.pad(w, ((0, 0), (0, cin_p - cin), (0, cout_p - cout)))
    return w.reshape(k * cin_p, cout_p).astype(jnp.bfloat16)


def basic_block_1d(x_ncl, w1_oik, w2_oik, g1, be1, m1, v1, g2, be2, m2, v2):
    """BasicBlock1d forward (eval mode).  x_ncl: (N, C, L) like PyTorch.

    Returns (N, C, L) float32.
    """
    N, C, L = x_ncl.shape
    Cout = w1_oik.shape[0]
    assert C == Cout, "no downsample path: inplanes must equal planes"

    Cp = max(128, _round_up(C, 128))                  # lane-dense channel axis

    # channels-last, lane-padded, bf16 for the MXU operands
    x = jnp.transpose(x_ncl, (0, 2, 1))               # (N, L, C)
    x = jnp.pad(x, ((0, 0), (0, 0), (0, Cp - C))).astype(jnp.bfloat16)

    w1 = _im2col_weights(w1_oik, Cp, Cp)
    w2 = _im2col_weights(w2_oik, Cp, Cp)
    s1, b1 = _fold_bn(g1, be1, m1, v1, Cp)
    s2, b2 = _fold_bn(g2, be2, m2, v2, Cp)

    out = pl.pallas_call(
        basic_block_kernel,
        out_shape=jax.ShapeDtypeStruct((N, L, Cp), jnp.float32),
        grid_spec=pltpu.PrefetchScalarGridSpec(
            num_scalar_prefetch=0,
            grid=(N,),
            in_specs=[
                pl.BlockSpec((1, L, Cp), lambda n: (n, 0, 0)),
                pl.BlockSpec((K * Cp, Cp), lambda n: (0, 0)),
                pl.BlockSpec((K * Cp, Cp), lambda n: (0, 0)),
                pl.BlockSpec((1, Cp), lambda n: (0, 0)),
                pl.BlockSpec((1, Cp), lambda n: (0, 0)),
                pl.BlockSpec((1, Cp), lambda n: (0, 0)),
                pl.BlockSpec((1, Cp), lambda n: (0, 0)),
            ],
            out_specs=pl.BlockSpec((1, L, Cp), lambda n: (n, 0, 0)),
            scratch_shapes=[
                pltpu.VMEM((L + 2 * SUB, Cp), jnp.bfloat16),   # padded x
                pltpu.VMEM((L + 2 * SUB, Cp), jnp.bfloat16),   # padded h
            ],
        ),
        compiler_params=pltpu.CompilerParams(
            dimension_semantics=("parallel",)),
    )(x, w1, w2, s1, b1, s2, b2)

    # drop channel padding, back to PyTorch (N, C, L) layout
    return jnp.transpose(out[:, :, :C], (0, 2, 1))


def reference_jax(x_ncl, w1_oik, w2_oik, g1, be1, m1, v1, g2, be2, m2, v2,
                  matmul_dtype=jnp.float32):
    """Pure-JAX reference of BasicBlock1d forward (eval mode), NCL layout.

    matmul_dtype=bfloat16 mirrors the kernel's mixed-precision scheme
    (bf16 conv operands, f32 accumulation / BN / residual).
    """
    xc = x_ncl.astype(matmul_dtype)

    def conv1d(x, w):
        return lax.conv_general_dilated(
            x.astype(matmul_dtype), w.astype(matmul_dtype),
            window_strides=(1,), padding=[(PAD, PAD)],
            dimension_numbers=("NCH", "OIH", "NCH"),
            preferred_element_type=jnp.float32)

    def bn(x, g, b, m, v):
        s = g / jnp.sqrt(v + BN_EPS)
        return x * s[None, :, None] + (b - m * s)[None, :, None]

    out = jnp.maximum(bn(conv1d(xc, w1_oik), g1, be1, m1, v1), 0.0)
    out = bn(conv1d(out, w2_oik), g2, be2, m2, v2)
    return jnp.maximum(out + xc.astype(jnp.float32), 0.0)


if __name__ == "__main__":
    # small shapes: batch=2, channels (inplanes = planes) = 8, length = 16
    N, C, L = 2, 8, 16

    key = jax.random.PRNGKey(0)
    kx, kw1, kw2, kg1, kb1, km1, kv1, kg2, kb2, km2, kv2 = jax.random.split(key, 11)

    x_ncl = jax.random.normal(kx, (N, C, L), jnp.float32)          # PyTorch layout
    # conv weights in PyTorch layout (Cout, Cin, K)
    w1_oik = jax.random.normal(kw1, (C, C, K), jnp.float32) * 0.1
    w2_oik = jax.random.normal(kw2, (C, C, K), jnp.float32) * 0.1
    # batchnorm params / running stats (deterministic, synthetic)
    g1 = jax.random.normal(kg1, (C,), jnp.float32) * 0.1 + 1.0
    be1 = jax.random.normal(kb1, (C,), jnp.float32) * 0.1
    m1 = jax.random.normal(km1, (C,), jnp.float32) * 0.1
    v1 = jax.random.uniform(kv1, (C,), jnp.float32, 0.5, 1.5)
    g2 = jax.random.normal(kg2, (C,), jnp.float32) * 0.1 + 1.0
    be2 = jax.random.normal(kb2, (C,), jnp.float32) * 0.1
    m2 = jax.random.normal(km2, (C,), jnp.float32) * 0.1
    v2 = jax.random.uniform(kv2, (C,), jnp.float32, 0.5, 1.5)

    out_ncl = basic_block_1d(x_ncl, w1_oik, w2_oik,
                             g1, be1, m1, v1, g2, be2, m2, v2)
    out_ncl = jax.block_until_ready(out_ncl)

    # tight check against a reference using the same bf16 matmul precision
    ref_bf16 = reference_jax(x_ncl, w1_oik, w2_oik,
                             g1, be1, m1, v1, g2, be2, m2, v2,
                             matmul_dtype=jnp.bfloat16)
    assert jnp.allclose(out_ncl, ref_bf16, atol=2e-3, rtol=2e-3), \
        "mismatch vs bf16-precision reference"

    # loose sanity check against the full-f32 module semantics
    ref_f32 = reference_jax(x_ncl, w1_oik, w2_oik,
                            g1, be1, m1, v1, g2, be2, m2, v2,
                            matmul_dtype=jnp.float32)
    assert float(jnp.max(jnp.abs(out_ncl - ref_f32))) < 0.1, \
        "mismatch vs f32 reference beyond bf16 tolerance"

    print("KERNEL_OK")
</pallas_src>

<mosaic_0001>
module attributes {stable_mosaic.version = 11 : i64} {
  func.func @basic_block_kernel(%arg0: i32, %arg1: memref<1x16x128xbf16, #tpu.memory_space<vmem>>, %arg2: memref<896x128xbf16, #tpu.memory_space<vmem>>, %arg3: memref<896x128xbf16, #tpu.memory_space<vmem>>, %arg4: memref<1x128xf32, #tpu.memory_space<vmem>>, %arg5: memref<1x128xf32, #tpu.memory_space<vmem>>, %arg6: memref<1x128xf32, #tpu.memory_space<vmem>>, %arg7: memref<1x128xf32, #tpu.memory_space<vmem>>, %arg8: memref<1x16x128xf32, #tpu.memory_space<vmem>>, %arg9: memref<32x128xbf16, #tpu.memory_space<vmem>>, %arg10: memref<32x128xbf16, #tpu.memory_space<vmem>>) attributes {dimension_semantics = [#tpu.dimension_semantics<parallel>], iteration_bounds = array<i64: 2>, scalar_prefetch = 0 : i64, scratch_operands = 2 : i64, tpu.core_type = #tpu.core_type<tc>, window_params = [{transform_indices = @transform_0, window_bounds = array<i64: 1, 16, 128>}, {pipeline_mode = #tpu.pipeline_mode<synchronous>, transform_indices = @transform_1, window_bounds = array<i64: 896, 128>}, {pipeline_mode = #tpu.pipeline_mode<synchronous>, transform_indices = @transform_2, window_bounds = array<i64: 896, 128>}, {pipeline_mode = #tpu.pipeline_mode<synchronous>, transform_indices = @transform_3, window_bounds = array<i64: 1, 128>}, {pipeline_mode = #tpu.pipeline_mode<synchronous>, transform_indices = @transform_4, window_bounds = array<i64: 1, 128>}, {pipeline_mode = #tpu.pipeline_mode<synchronous>, transform_indices = @transform_5, window_bounds = array<i64: 1, 128>}, {pipeline_mode = #tpu.pipeline_mode<synchronous>, transform_indices = @transform_6, window_bounds = array<i64: 1, 128>}, {transform_indices = @transform_7, window_bounds = array<i64: 1, 16, 128>}]} {
    %cst = arith.constant 0.000000e+00 : bf16
    %0 = vector.broadcast %cst : bf16 to vector<8x128xbf16>
    %c0 = arith.constant 0 : index
    %c0_0 = arith.constant 0 : index
    %1 = vector.load %arg9[%c0, %c0_0] : memref<32x128xbf16, #tpu.memory_space<vmem>>, vector<8x128xbf16>
    tpu.vector_store %arg9[%c0, %c0_0], %0 {strides = array<i32>} : memref<32x128xbf16, #tpu.memory_space<vmem>>, vector<8x128xbf16>,
    %c24 = arith.constant 24 : index
    %c0_1 = arith.constant 0 : index
    %2 = vector.load %arg9[%c24, %c0_1] : memref<32x128xbf16, #tpu.memory_space<vmem>>, vector<8x128xbf16>
    tpu.vector_store %arg9[%c24, %c0_1], %0 {strides = array<i32>} : memref<32x128xbf16, #tpu.memory_space<vmem>>, vector<8x128xbf16>,
    %c0_2 = arith.constant 0 : index
    %c0_3 = arith.constant 0 : index
    %3 = vector.load %arg10[%c0_2, %c0_3] : memref<32x128xbf16, #tpu.memory_space<vmem>>, vector<8x128xbf16>
    tpu.vector_store %arg10[%c0_2, %c0_3], %0 {strides = array<i32>} : memref<32x128xbf16, #tpu.memory_space<vmem>>, vector<8x128xbf16>,
    %c24_4 = arith.constant 24 : index
    %c0_5 = arith.constant 0 : index
    %4 = vector.load %arg10[%c24_4, %c0_5] : memref<32x128xbf16, #tpu.memory_space<vmem>>, vector<8x128xbf16>
    tpu.vector_store %arg10[%c24_4, %c0_5], %0 {strides = array<i32>} : memref<32x128xbf16, #tpu.memory_space<vmem>>, vector<8x128xbf16>,
    %c0_6 = arith.constant 0 : index
    %c0_7 = arith.constant 0 : index
    %c0_8 = arith.constant 0 : index
    %5 = vector.load %arg1[%c0_6, %c0_7, %c0_8] : memref<1x16x128xbf16, #tpu.memory_space<vmem>>, vector<1x16x128xbf16>
    %6 = vector.shape_cast %5 : vector<1x16x128xbf16> to vector<16x128xbf16>
    %c8 = arith.constant 8 : index
    %c0_9 = arith.constant 0 : index
    %7 = vector.load %arg9[%c8, %c0_9] : memref<32x128xbf16, #tpu.memory_space<vmem>>, vector<16x128xbf16>
    tpu.vector_store %arg9[%c8, %c0_9], %6 {strides = array<i32>} : memref<32x128xbf16, #tpu.memory_space<vmem>>, vector<16x128xbf16>,
    %c5 = arith.constant 5 : index
    %c0_10 = arith.constant 0 : index
    %8 = vector.load %arg9[%c5, %c0_10] : memref<32x128xbf16, #tpu.memory_space<vmem>>, vector<16x128xbf16>
    %c6 = arith.constant 6 : index
    %c0_11 = arith.constant 0 : index
    %9 = vector.load %arg9[%c6, %c0_11] : memref<32x128xbf16, #tpu.memory_space<vmem>>, vector<16x128xbf16>
    %c7 = arith.constant 7 : index
    %c0_12 = arith.constant 0 : index
    %10 = vector.load %arg9[%c7, %c0_12] : memref<32x128xbf16, #tpu.memory_space<vmem>>, vector<16x128xbf16>
    %c8_13 = arith.constant 8 : index
    %c0_14 = arith.constant 0 : index
    %11 = vector.load %arg9[%c8_13, %c0_14] : memref<32x128xbf16, #tpu.memory_space<vmem>>, vector<16x128xbf16>
    %c9 = arith.constant 9 : index
    %c0_15 = arith.constant 0 : index
    %12 = vector.load %arg9[%c9, %c0_15] : memref<32x128xbf16, #tpu.memory_space<vmem>>, vector<16x128xbf16>
    %c10 = arith.constant 10 : index
    %c0_16 = arith.constant 0 : index
    %13 = vector.load %arg9[%c10, %c0_16] : memref<32x128xbf16, #tpu.memory_space<vmem>>, vector<16x128xbf16>
    %c11 = arith.constant 11 : index
    %c0_17 = arith.constant 0 : index
    %14 = vector.load %arg9[%c11, %c0_17] : memref<32x128xbf16, #tpu.memory_space<vmem>>, vector<16x128xbf16>
    %15 = tpu.concatenate %8, %9, %10, %11, %12, %13, %14 in 1 : vector<16x128xbf16>, vector<16x128xbf16>, vector<16x128xbf16>, vector<16x128xbf16>, vector<16x128xbf16>, vector<16x128xbf16>, vector<16x128xbf16> -> vector<16x896xbf16>
    %c0_18 = arith.constant 0 : index
    %c0_19 = arith.constant 0 : index
    %16 = vector.load %arg2[%c0_18, %c0_19] : memref<896x128xbf16, #tpu.memory_space<vmem>>, vector<896x128xbf16>
    %cst_20 = arith.constant dense<0.000000e+00> : vector<16x128xf32>
    %17 = tpu.matmul %15, %16, %cst_20 {dimension_numbers = #tpu.dot_dimension_numbers<[1], [0], [0], [1], [0, 0, 1, 1], [], []>} : vector<16x896xbf16>, vector<896x128xbf16>, vector<16x128xf32> -> vector<16x128xf32>
    %c0_21 = arith.constant 0 : index
    %c0_22 = arith.constant 0 : index
    %18 = vector.load %arg4[%c0_21, %c0_22] : memref<1x128xf32, #tpu.memory_space<vmem>>, vector<1x128xf32>
    %19 = vector.broadcast %18 : vector<1x128xf32> to vector<16x128xf32>
    %20 = arith.mulf %17, %19 : vector<16x128xf32>
    %c0_23 = arith.constant 0 : index
    %c0_24 = arith.constant 0 : index
    %21 = vector.load %arg5[%c0_23, %c0_24] : memref<1x128xf32, #tpu.memory_space<vmem>>, vector<1x128xf32>
    %22 = vector.broadcast %21 : vector<1x128xf32> to vector<16x128xf32>
    %23 = arith.addf %20, %22 : vector<16x128xf32>
    %cst_25 = arith.constant 0.000000e+00 : f32
    %24 = vector.broadcast %cst_25 : f32 to vector<16x128xf32>
    %25 = arith.maximumf %23, %24 : vector<16x128xf32>
    %26 = arith.truncf %25 : vector<16x128xf32> to vector<16x128xbf16>
    %c8_26 = arith.constant 8 : index
    %c0_27 = arith.constant 0 : index
    %27 = vector.load %arg10[%c8_26, %c0_27] : memref<32x128xbf16, #tpu.memory_space<vmem>>, vector<16x128xbf16>
    tpu.vector_store %arg10[%c8_26, %c0_27], %26 {strides = array<i32>} : memref<32x128xbf16, #tpu.memory_space<vmem>>, vector<16x128xbf16>,
    %c5_28 = arith.constant 5 : index
    %c0_29 = arith.constant 0 : index
    %28 = vector.load %arg10[%c5_28, %c0_29] : memref<32x128xbf16, #tpu.memory_space<vmem>>, vector<16x128xbf16>
    %c6_30 = arith.constant 6 : index
    %c0_31 = arith.constant 0 : index
    %29 = vector.load %arg10[%c6_30, %c0_31] : memref<32x128xbf16, #tpu.memory_space<vmem>>, vector<16x128xbf16>
    %c7_32 = arith.constant 7 : index
    %c0_33 = arith.constant 0 : index
    %30 = vector.load %arg10[%c7_32, %c0_33] : memref<32x128xbf16, #tpu.memory_space<vmem>>, vector<16x128xbf16>
    %c8_34 = arith.constant 8 : index
    %c0_35 = arith.constant 0 : index
    %31 = vector.load %arg10[%c8_34, %c0_35] : memref<32x128xbf16, #tpu.memory_space<vmem>>, vector<16x128xbf16>
    %c9_36 = arith.constant 9 : index
    %c0_37 = arith.constant 0 : index
    %32 = vector.load %arg10[%c9_36, %c0_37] : memref<32x128xbf16, #tpu.memory_space<vmem>>, vector<16x128xbf16>
    %c10_38 = arith.constant 10 : index
    %c0_39 = arith.constant 0 : index
    %33 = vector.load %arg10[%c10_38, %c0_39] : memref<32x128xbf16, #tpu.memory_space<vmem>>, vector<16x128xbf16>
    %c11_40 = arith.constant 11 : index
    %c0_41 = arith.constant 0 : index
    %34 = vector.load %arg10[%c11_40, %c0_41] : memref<32x128xbf16, #tpu.memory_space<vmem>>, vector<16x128xbf16>
    %35 = tpu.concatenate %28, %29, %30, %31, %32, %33, %34 in 1 : vector<16x128xbf16>, vector<16x128xbf16>, vector<16x128xbf16>, vector<16x128xbf16>, vector<16x128xbf16>, vector<16x128xbf16>, vector<16x128xbf16> -> vector<16x896xbf16>
    %c0_42 = arith.constant 0 : index
    %c0_43 = arith.constant 0 : index
    %36 = vector.load %arg3[%c0_42, %c0_43] : memref<896x128xbf16, #tpu.memory_space<vmem>>, vector<896x128xbf16>
    %cst_44 = arith.constant dense<0.000000e+00> : vector<16x128xf32>
    %37 = tpu.matmul %35, %36, %cst_44 {dimension_numbers = #tpu.dot_dimension_numbers<[1], [0], [0], [1], [0, 0, 1, 1], [], []>} : vector<16x896xbf16>, vector<896x128xbf16>, vector<16x128xf32> -> vector<16x128xf32>
    %c0_45 = arith.constant 0 : index
    %c0_46 = arith.constant 0 : index
    %c0_47 = arith.constant 0 : index
    %38 = vector.load %arg1[%c0_45, %c0_46, %c0_47] : memref<1x16x128xbf16, #tpu.memory_space<vmem>>, vector<1x16x128xbf16>
    %39 = vector.shape_cast %38 : vector<1x16x128xbf16> to vector<16x128xbf16>
    %40 = arith.extf %39 : vector<16x128xbf16> to vector<16x128xf32>
    %c0_48 = arith.constant 0 : index
    %c0_49 = arith.constant 0 : index
    %41 = vector.load %arg6[%c0_48, %c0_49] : memref<1x128xf32, #tpu.memory_space<vmem>>, vector<1x128xf32>
    %42 = vector.broadcast %41 : vector<1x128xf32> to vector<16x128xf32>
    %43 = arith.mulf %37, %42 : vector<16x128xf32>
    %c0_50 = arith.constant 0 : index
    %c0_51 = arith.constant 0 : index
    %44 = vector.load %arg7[%c0_50, %c0_51] : memref<1x128xf32, #tpu.memory_space<vmem>>, vector<1x128xf32>
    %45 = vector.broadcast %44 : vector<1x128xf32> to vector<16x128xf32>
    %46 = arith.addf %43, %45 : vector<16x128xf32>
    %47 = arith.addf %46, %40 : vector<16x128xf32>
    %cst_52 = arith.constant 0.000000e+00 : f32
    %48 = vector.broadcast %cst_52 : f32 to vector<16x128xf32>
    %49 = arith.maximumf %47, %48 : vector<16x128xf32>
    %c0_53 = arith.constant 0 : index
    %c0_54 = arith.constant 0 : index
    %c0_55 = arith.constant 0 : index
    %50 = vector.load %arg8[%c0_53, %c0_54, %c0_55] : memref<1x16x128xf32, #tpu.memory_space<vmem>>, vector<1x16x128xf32>
    %51 = vector.shape_cast %50 : vector<1x16x128xf32> to vector<16x128xf32>
    %52 = vector.shape_cast %49 : vector<16x128xf32> to vector<1x16x128xf32>
    tpu.vector_store %arg8[%c0_53, %c0_54, %c0_55], %52 {strides = array<i32>} : memref<1x16x128xf32, #tpu.memory_space<vmem>>, vector<1x16x128xf32>,
    return
  }
  func.func @transform_0(%arg0: i32) -> (i32, i32, i32) {
    %c0_i32 = arith.constant 0 : i32
    %c0_i32_0 = arith.constant 0 : i32
    %c0_i32_1 = arith.constant 0 : i32
    return %arg0, %c0_i32, %c0_i32_0 : i32, i32, i32
  }
  func.func @transform_1(%arg0: i32) -> (i32, i32) {
    %c0_i32 = arith.constant 0 : i32
    %c0_i32_0 = arith.constant 0 : i32
    %c0_i32_1 = arith.constant 0 : i32
    return %c0_i32, %c0_i32_0 : i32, i32
  }
  func.func @transform_2(%arg0: i32) -> (i32, i32) {
    %c0_i32 = arith.constant 0 : i32
    %c0_i32_0 = arith.constant 0 : i32
    %c0_i32_1 = arith.constant 0 : i32
    return %c0_i32, %c0_i32_0 : i32, i32
  }
  func.func @transform_3(%arg0: i32) -> (i32, i32) {
    %c0_i32 = arith.constant 0 : i32
    %c0_i32_0 = arith.constant 0 : i32
    %c0_i32_1 = arith.constant 0 : i32
    return %c0_i32, %c0_i32_0 : i32, i32
  }
  func.func @transform_4(%arg0: i32) -> (i32, i32) {
    %c0_i32 = arith.constant 0 : i32
    %c0_i32_0 = arith.constant 0 : i32
    %c0_i32_1 = arith.constant 0 : i32
    return %c0_i32, %c0_i32_0 : i32, i32
  }
  func.func @transform_5(%arg0: i32) -> (i32, i32) {
    %c0_i32 = arith.constant 0 : i32
    %c0_i32_0 = arith.constant 0 : i32
    %c0_i32_1 = arith.constant 0 : i32
    return %c0_i32, %c0_i32_0 : i32, i32
  }
  func.func @transform_6(%arg0: i32) -> (i32, i32) {
    %c0_i32 = arith.constant 0 : i32
    %c0_i32_0 = arith.constant 0 : i32
    %c0_i32_1 = arith.constant 0 : i32
    return %c0_i32, %c0_i32_0 : i32, i32
  }
  func.func @transform_7(%arg0: i32) -> (i32, i32, i32) {
    %c0_i32 = arith.constant 0 : i32
    %c0_i32_0 = arith.constant 0 : i32
    %c0_i32_1 = arith.constant 0 : i32
    return %arg0, %c0_i32, %c0_i32_0 : i32, i32, i32
  }
}

</mosaic_0001>

<llo_original>
// kernel: tpu_custom_call.1
$region0: #{tpu_custom_call.1}
  #allocation0 [shape = 'u32[]', space=smem, size = 0x4, offset = 0x4, fixed_abs, tag = 'smem constant byte address 0x4 - core index']
  #allocation1 [shape = 'u32[72,128]{1,0:T(1,128)}', space=vmem, size = 0x9000, scoped, tag = 'internal scratch']
  #allocation2 [shape = 'bf16[32,128]{1,0:T(8,128)(2,1)}', space=vmem, size = 0x2000, scoped, tag = 'scratch operand']
  #allocation3 [shape = 'bf16[32,128]{1,0:T(8,128)(2,1)}', space=vmem, size = 0x2000, scoped, tag = 'scratch operand']
  %s0 = inlined_call_operand.hbm [shape: bf16[2,16,128], index: 0, kind: input, shape index: {}]
  %s1 = inlined_call_operand.hbm [shape: bf16[896,128], index: 1, kind: input, shape index: {}]
  %s2 = inlined_call_operand.hbm [shape: bf16[896,128], index: 2, kind: input, shape index: {}]
  %s3 = inlined_call_operand.vmem [shape: f32[1,128], index: 3, kind: input, shape index: {}]
  %s4 = inlined_call_operand.vmem [shape: f32[1,128], index: 4, kind: input, shape index: {}]
  %s5 = inlined_call_operand.vmem [shape: f32[1,128], index: 5, kind: input, shape index: {}]
  %s6 = inlined_call_operand.vmem [shape: f32[1,128], index: 6, kind: input, shape index: {}]
  %s7 = inlined_call_operand.hbm [shape: f32[2,16,128], index: 7, kind: output, shape index: {}]
  %s8 = sld [smem:[#allocation0]]
  $region73: #{tpu_custom_call.1} parent=0
    _
  %s10 = ssub.s32 1, %s8
  %s11 = scalar_select 0, %s10, %s8
  $region1: #{tpu_custom_call.1} parent=0
    #allocation4 [shape = 'u8[8192]{0}', space=vmem, size = 0x2000, scoped, tag = 'input window, operand 0']
    #allocation5 [shape = 's32[2]{0}', space=sflag, size = 0x8, scoped, tag = 'scoped memory for tpu_custom_call.1']
    #allocation6 [shape = 's32[2]{0}', space=sflag, size = 0x8, scoped, tag = 'scoped memory for tpu_custom_call.1']
    #allocation7 [shape = 'u8[229376]{0}', space=vmem, size = 0x38000, scoped, tag = 'input window, operand 1, single buffered']
    #allocation8 [shape = 's32[1]{0}', space=sflag, size = 0x4, scoped, tag = 'scoped memory for tpu_custom_call.1']
    #allocation9 [shape = 'u8[229376]{0}', space=vmem, size = 0x38000, scoped, tag = 'input window, operand 2, single buffered']
    #allocation10 [shape = 'u8[16384]{0}', space=vmem, size = 0x4000, scoped, tag = 'output window, operand 0']
    %12 = vsyncpa [#allocation5], 0
    %s13 = scalar_lea.sflag [#allocation5], 1
    %14 = vsyncpa %s13, 0
    %15 = vsyncpa [#allocation8], 0
    %16 = vsyncpa [#allocation6], 0
    %s17 = scalar_lea.sflag [#allocation6], 1
    %18 = vsyncpa %s17, 0
    loop: start=0, step=1, limit=4
    $region2: #{tpu_custom_call.1} parent=1 // loop_pre_header
      _
    $region3: #{tpu_custom_call.1} parent=1 // loop_header
      %s20 = sphi 0, %s24
      %p21 = scmp.ge.s32.totalorder %s20, 4
      %s30 = sphi 0, %s32
      %s33 = sphi 0, %s30
      %s34 = sphi 0, %s33
      %s50 = sphi 0, %s34
      %s54 = sphi 0, %s54
      %s56 = sphi 0, %s54
      %s57 = sphi 0, %s56
      %s71 = sphi 0, %s57
      %s75 = sphi 0, %s75
      %s77 = sphi 0, %s75
      %s78 = sphi 0, %s77
      %s92 = sphi 0, %s78
      %s96 = sphi 0, %s96
      %s98 = sphi 0, %s96
      %s99 = sphi 0, %s98
      %s113 = sphi 0, %s99
      %s117 = sphi 0, %s117
      %s119 = sphi 0, %s117
      %s120 = sphi 0, %s119
      %s134 = sphi 0, %s120
      %s138 = sphi 0, %s138
      %s140 = sphi 0, %s138
      %s141 = sphi 0, %s140
      %s155 = sphi 0, %s141
      %s159 = sphi 0, %s159
      %s161 = sphi 0, %s159
      %s162 = sphi 0, %s161
      %s176 = sphi 0, %s162
      %s182 = sphi 0, %s184
      %s185 = sphi 0, %s182
      %s186 = sphi 0, %s185
      %s202 = sphi 0, %s186
    $region4: #{tpu_custom_call.1} parent=1 // loop_header_branch
      %23 = sbr.rel (%p21) target = $region8
    $region5: #{tpu_custom_call.1} parent=1 // loop_body
      %s25 = ssub.s32 %s20, 1
      %s26 = ssub.s32 %s20, 2
      %s27 = sadd.s32 %s20, 1
      %s28 = ssub.s32 %s20, %s27
      %p29 = scmp.eq.s32.totalorder %s28, 0
      %s31 = sadd.s32 %s30, 1
      %s32 = scalar_select %p29, %s30, %s31
      %p35 = pneg %p29
      %p36 = scmp.eq.s32.totalorder %s20, 1
      %p37 = por %p35, %p36
      %p38 = scmp.ne.s32.totalorder %s30, %s33
      %p39 = scmp.eq.s32.totalorder %s20, 0
      %p40 = por %p38, %p39
      %p41 = scmp.ne.s32.totalorder %s30, %s33
      %p42 = scmp.eq.s32.totalorder %s25, 1
      %p43 = por %p41, %p42
      %p44 = scmp.ne.s32.totalorder %s33, %s34
      %p45 = scmp.eq.s32.totalorder %s25, 0
      %p46 = por %p44, %p45
      %p47 = scmp.ne.s32.totalorder %s33, %s34
      %p48 = scmp.eq.s32.totalorder %s26, 1
      %p49 = por %p47, %p48
      %p51 = scmp.ne.s32.totalorder %s34, %s50
      %p52 = scmp.eq.s32.totalorder %s26, 0
      %p53 = por %p51, %p52
      %s55 = sadd.s32 %s54, 1
      %p58 = scmp.eq.s32.totalorder %s20, 1
      %p59 = scmp.ne.s32.totalorder %s54, %s56
      %p60 = scmp.eq.s32.totalorder %s20, 0
      %p61 = por %p59, %p60
      %p62 = scmp.ne.s32.totalorder %s54, %s56
      %p63 = scmp.eq.s32.totalorder %s25, 1
      %p64 = por %p62, %p63
      %p65 = scmp.ne.s32.totalorder %s56, %s57
      %p66 = scmp.eq.s32.totalorder %s25, 0
      %p67 = por %p65, %p66
      %p68 = scmp.ne.s32.totalorder %s56, %s57
      %p69 = scmp.eq.s32.totalorder %s26, 1
      %p70 = por %p68, %p69
      %p72 = scmp.ne.s32.totalorder %s57, %s71
      %p73 = scmp.eq.s32.totalorder %s26, 0
      %p74 = por %p72, %p73
      %s76 = sadd.s32 %s75, 1
      %p79 = scmp.eq.s32.totalorder %s20, 1
      %p80 = scmp.ne.s32.totalorder %s75, %s77
      %p81 = scmp.eq.s32.totalorder %s20, 0
      %p82 = por %p80, %p81
      %p83 = scmp.ne.s32.totalorder %s75, %s77
      %p84 = scmp.eq.s32.totalorder %s25, 1
      %p85 = por %p83, %p84
      %p86 = scmp.ne.s32.totalorder %s77, %s78
      %p87 = scmp.eq.s32.totalorder %s25, 0
      %p88 = por %p86, %p87
      %p89 = scmp.ne.s32.totalorder %s77, %s78
      %p90 = scmp.eq.s32.totalorder %s26, 1
      %p91 = por %p89, %p90
      %p93 = scmp.ne.s32.totalorder %s78, %s92
      %p94 = scmp.eq.s32.totalorder %s26, 0
      %p95 = por %p93, %p94
      %s97 = sadd.s32 %s96, 1
      %p100 = scmp.eq.s32.totalorder %s20, 1
      %p101 = scmp.ne.s32.totalorder %s96, %s98
      %p102 = scmp.eq.s32.totalorder %s20, 0
      %p103 = por %p101, %p102
      %p104 = scmp.ne.s32.totalorder %s96, %s98
      %p105 = scmp.eq.s32.totalorder %s25, 1
      %p106 = por %p104, %p105
      %p107 = scmp.ne.s32.totalorder %s98, %s99
      %p108 = scmp.eq.s32.totalorder %s25, 0
      %p109 = por %p107, %p108
      %p110 = scmp.ne.s32.totalorder %s98, %s99
      %p111 = scmp.eq.s32.totalorder %s26, 1
      %p112 = por %p110, %p111
      %p114 = scmp.ne.s32.totalorder %s99, %s113
      %p115 = scmp.eq.s32.totalorder %s26, 0
      %p116 = por %p114, %p115
      %s118 = sadd.s32 %s117, 1
      %p121 = scmp.eq.s32.totalorder %s20, 1
      %p122 = scmp.ne.s32.totalorder %s117, %s119
      %p123 = scmp.eq.s32.totalorder %s20, 0
      %p124 = por %p122, %p123
      %p125 = scmp.ne.s32.totalorder %s117, %s119
      %p126 = scmp.eq.s32.totalorder %s25, 1
      %p127 = por %p125, %p126
      %p128 = scmp.ne.s32.totalorder %s119, %s120
      %p129 = scmp.eq.s32.totalorder %s25, 0
      %p130 = por %p128, %p129
      %p131 = scmp.ne.s32.totalorder %s119, %s120
      %p132 = scmp.eq.s32.totalorder %s26, 1
      %p133 = por %p131, %p132
      %p135 = scmp.ne.s32.totalorder %s120, %s134
      %p136 = scmp.eq.s32.totalorder %s26, 0
      %p137 = por %p135, %p136
      %s139 = sadd.s32 %s138, 1
      %p142 = scmp.eq.s32.totalorder %s20, 1
      %p143 = scmp.ne.s32.totalorder %s138, %s140
      %p144 = scmp.eq.s32.totalorder %s20, 0
      %p145 = por %p143, %p144
      %p146 = scmp.ne.s32.totalorder %s138, %s140
      %p147 = scmp.eq.s32.totalorder %s25, 1
      %p148 = por %p146, %p147
      %p149 = scmp.ne.s32.totalorder %s140, %s141
      %p150 = scmp.eq.s32.totalorder %s25, 0
      %p151 = por %p149, %p150
      %p152 = scmp.ne.s32.totalorder %s140, %s141
      %p153 = scmp.eq.s32.totalorder %s26, 1
      %p154 = por %p152, %p153
      %p156 = scmp.ne.s32.totalorder %s141, %s155
      %p157 = scmp.eq.s32.totalorder %s26, 0
      %p158 = por %p156, %p157
      %s160 = sadd.s32 %s159, 1
      %p163 = scmp.eq.s32.totalorder %s20, 1
      %p164 = scmp.ne.s32.totalorder %s159, %s161
      %p165 = scmp.eq.s32.totalorder %s20, 0
      %p166 = por %p164, %p165
      %p167 = scmp.ne.s32.totalorder %s159, %s161
      %p168 = scmp.eq.s32.totalorder %s25, 1
      %p169 = por %p167, %p168
      %p170 = scmp.ne.s32.totalorder %s161, %s162
      %p171 = scmp.eq.s32.totalorder %s25, 0
      %p172 = por %p170, %p171
      %p173 = scmp.ne.s32.totalorder %s161, %s162
      %p174 = scmp.eq.s32.totalorder %s26, 1
      %p175 = por %p173, %p174
      %p177 = scmp.ne.s32.totalorder %s162, %s176
      %p178 = scmp.eq.s32.totalorder %s26, 0
      %p179 = por %p177, %p178
      %s180 = ssub.s32 %s20, %s27
      %p181 = scmp.eq.s32.totalorder %s180, 0
      %s183 = sadd.s32 %s182, 1
      %s184 = scalar_select %p181, %s182, %s183
      %p187 = pneg %p181
      %p188 = scmp.eq.s32.totalorder %s20, 1
      %p189 = por %p187, %p188
      %p190 = scmp.ne.s32.totalorder %s182, %s185
      %p191 = scmp.eq.s32.totalorder %s20, 0
      %p192 = por %p190, %p191
      %p193 = scmp.ne.s32.totalorder %s182, %s185
      %p194 = scmp.eq.s32.totalorder %s25, 1
      %p195 = por %p193, %p194
      %p196 = scmp.ne.s32.totalorder %s185, %s186
      %p197 = scmp.eq.s32.totalorder %s25, 0
      %p198 = por %p196, %p197
      %p199 = scmp.ne.s32.totalorder %s185, %s186
      %p200 = scmp.eq.s32.totalorder %s26, 1
      %p201 = por %p199, %p200
      %p203 = scmp.ne.s32.totalorder %s186, %s202
      %p204 = scmp.eq.s32.totalorder %s26, 0
      %p205 = por %p203, %p204
      %p206 = scmp.le.s32.totalorder 1, %s20
      %p207 = scmp.lt.s32.totalorder %s20, 3
      %p208 = pnand %p206, %p207
      %p209 = pneg %p208
      // Predicated region
      $region9: #{tpu_custom_call.1} parent=5 // pred_check
        _
      $region10: #{tpu_custom_call.1} parent=5 // pred_check_branch
        %211 = sbr.rel (%p208) target = $region12
      $region11: #{tpu_custom_call.1} parent=5 // pred_region
        %s212 = ssub.s32 %s20, 1
        // Predicated region
        $region13: #{tpu_custom_call.1} parent=11 // pred_check
          %p213 = pneg %p67
        $region14: #{tpu_custom_call.1} parent=11 // pred_check_branch
          %215 = sbr.rel (%p213) target = $region16
        $region15: #{tpu_custom_call.1} parent=11 // pred_region
          %217 = vsyncadd [#allocation8], 0
          %s218 = sshll.u32 %s1, 4
          %s219 = int_to_ptr.hbm [resolvable:$true] %s218
          %s220 = sshll.u32 [#allocation7], 4
          %s221 = int_to_ptr.vmem [resolvable:$true] %s220
          %226 = dma.hbm_to_vmem [thread:$0]  %s219, 7168, %s221, [#allocation8], 64, 64, 4
        $region16: #{tpu_custom_call.1} parent=11 // pred_fallthru
          _
        // Predicated region
        $region17: #{tpu_custom_call.1} parent=11 // pred_check
          %p227 = pneg %p88
        $region18: #{tpu_custom_call.1} parent=11 // pred_check_branch
          %229 = sbr.rel (%p227) target = $region20
        $region19: #{tpu_custom_call.1} parent=11 // pred_region
          %231 = vsyncadd [#allocation8], 0
          %s232 = sshll.u32 %s2, 4
          %s233 = int_to_ptr.hbm [resolvable:$true] %s232
          %s234 = sshll.u32 [#allocation9], 4
          %s235 = int_to_ptr.vmem [resolvable:$true] %s234
          %240 = dma.hbm_to_vmem [thread:$0]  %s233, 7168, %s235, [#allocation8], 64, 64, 4
        $region20: #{tpu_custom_call.1} parent=11 // pred_fallthru
          _
        // Predicated region
        $region21: #{tpu_custom_call.1} parent=11 // pred_check
          %p241 = pneg %p109
        $region22: #{tpu_custom_call.1} parent=11 // pred_check_branch
          %243 = sbr.rel (%p241) target = $region24
        $region23: #{tpu_custom_call.1} parent=11 // pred_region
          _
        $region24: #{tpu_custom_call.1} parent=11 // pred_fallthru
          _
        // Predicated region
        $region25: #{tpu_custom_call.1} parent=11 // pred_check
          %p244 = pneg %p130
        $region26: #{tpu_custom_call.1} parent=11 // pred_check_branch
          %246 = sbr.rel (%p244) target = $region28
        $region27: #{tpu_custom_call.1} parent=11 // pred_region
          _
        $region28: #{tpu_custom_call.1} parent=11 // pred_fallthru
          _
        // Predicated region
        $region29: #{tpu_custom_call.1} parent=11 // pred_check
          %p247 = pneg %p151
        $region30: #{tpu_custom_call.1} parent=11 // pred_check_branch
          %249 = sbr.rel (%p247) target = $region32
        $region31: #{tpu_custom_call.1} parent=11 // pred_region
          _
        $region32: #{tpu_custom_call.1} parent=11 // pred_fallthru
          _
        // Predicated region
        $region33: #{tpu_custom_call.1} parent=11 // pred_check
          %p250 = pneg %p172
        $region34: #{tpu_custom_call.1} parent=11 // pred_check_branch
          %252 = sbr.rel (%p250) target = $region36
        $region35: #{tpu_custom_call.1} parent=11 // pred_region
          _
        $region36: #{tpu_custom_call.1} parent=11 // pred_fallthru
          _
      $region12: #{tpu_custom_call.1} parent=5 // pred_fallthru
        _
      %p253 = scmp.lt.s32.totalorder %s20, 2
      // Predicated region
      $region37: #{tpu_custom_call.1} parent=5 // pred_check
        %p254 = pneg %p253
      $region38: #{tpu_custom_call.1} parent=5 // pred_check_branch
        %256 = sbr.rel (%p254) target = $region40
      $region39: #{tpu_custom_call.1} parent=5 // pred_region
        // Predicated region
        $region41: #{tpu_custom_call.1} parent=39 // pred_check
          %p257 = pneg %p40
        $region42: #{tpu_custom_call.1} parent=39 // pred_check_branch
          %259 = sbr.rel (%p257) target = $region44
        $region43: #{tpu_custom_call.1} parent=39 // pred_region
          %s260 = sand.u32 %s30, 1
          %s261 = scalar_lea.sflag [#allocation5], %s260
          %s262 = sand.u32 %s30, 1
          %s263 = smul.addr %s262, 8
          %s264 = scalar_lea.vmem [#allocation4], %s263
          %266 = vsyncadd %s261, 0
          %s267 = smul.addr %s20, 2
          %s268 = smul.addr %s267, 4
          %s269 = scalar_lea.hbm %s0, %s268
          %s270 = sshll.u32 %s269, 4
          %s271 = int_to_ptr.hbm [resolvable:$true] %s270
          %s272 = sshll.u32 %s264, 4
          %s273 = int_to_ptr.vmem [resolvable:$true] %s272
          %278 = dma.hbm_to_vmem [thread:$0]  %s271, 128, %s273, %s261, 64, 64, 4
        $region44: #{tpu_custom_call.1} parent=39 // pred_fallthru
          _
      $region40: #{tpu_custom_call.1} parent=5 // pred_fallthru
        _
      %p279 = scmp.le.s32.totalorder 1, %s20
      %p280 = scmp.lt.s32.totalorder %s20, 3
      %p281 = pnand %p279, %p280
      %p282 = pneg %p281
      // Predicated region
      $region45: #{tpu_custom_call.1} parent=5 // pred_check
        _
      $region46: #{tpu_custom_call.1} parent=5 // pred_check_branch
        %284 = sbr.rel (%p281) target = $region48
      $region47: #{tpu_custom_call.1} parent=5 // pred_region
        %s285 = ssub.s32 %s20, 1
        %s286 = sand.u32 %s33, 1
        %s287 = scalar_lea.sflag [#allocation5], %s286
        %s288 = sand.u32 %s33, 1
        %s289 = smul.addr %s288, 8
        %s290 = scalar_lea.vmem [#allocation4], %s289
        // Predicated region
        $region49: #{tpu_custom_call.1} parent=47 // pred_check
          %p291 = pneg %p46
        $region50: #{tpu_custom_call.1} parent=47 // pred_check_branch
          %293 = sbr.rel (%p291) target = $region52
        $region51: #{tpu_custom_call.1} parent=47 // pred_region
          %295 = dma.done %s287, 128
        $region52: #{tpu_custom_call.1} parent=47 // pred_fallthru
          _
        // Predicated region
        $region53: #{tpu_custom_call.1} parent=47 // pred_check
          %p296 = pneg %p67
        $region54: #{tpu_custom_call.1} parent=47 // pred_check_branch
          %298 = sbr.rel (%p296) target = $region56
        $region55: #{tpu_custom_call.1} parent=47 // pred_region
          %300 = dma.done [#allocation8], 7168
        $region56: #{tpu_custom_call.1} parent=47 // pred_fallthru
          _
        // Predicated region
        $region57: #{tpu_custom_call.1} parent=47 // pred_check
          %p301 = pneg %p88
        $region58: #{tpu_custom_call.1} parent=47 // pred_check_branch
          %303 = sbr.rel (%p301) target = $region60
        $region59: #{tpu_custom_call.1} parent=47 // pred_region
          %305 = dma.done [#allocation8], 7168
        $region60: #{tpu_custom_call.1} parent=47 // pred_fallthru
          _
        %s306 = sand.u32 %s33, 1
        %s307 = scalar_lea.sflag [#allocation5], %s306
        %s308 = sand.u32 %s33, 1
        %s309 = smul.addr %s308, 8
        %s310 = scalar_lea.vmem [#allocation4], %s309
        %p311 = pneg %p46
        %p312 = pneg %p43
        %p313 = pneg %p67
        %p314 = pneg %p64
        %p315 = pneg %p88
        %p316 = pneg %p85
        %p317 = pneg %p109
        %p318 = pneg %p106
        %p319 = pneg %p130
        %p320 = pneg %p127
        %p321 = pneg %p151
        %p322 = pneg %p148
        %p323 = pneg %p172
        %p324 = pneg %p169
        %p325 = pneg %p198
        %p326 = pneg %p195
        %s327 = sand.u32 %s185, 1
        %s328 = scalar_lea.sflag [#allocation6], %s327
        %s329 = sand.u32 %s185, 1
        %s330 = smul.addr %s329, 16
        %s331 = scalar_lea.vmem [#allocation10], %s330
        %333 = vst [vmem:[#allocation2] sm:$0xf] 0
        %334 = vst [vmem:[#allocation2 + $0xc] sm:$0xf] 0
        %335 = vst [vmem:[#allocation3] sm:$0xf] 0
        %336 = vst [vmem:[#allocation3 + $0xc] sm:$0xf] 0
        %v337 = vld [vmem:[%s290] sm:$0xf]
        %v338 = vld [vmem:[%s290 + $0x4] sm:$0xf]
        %339 = vst [vmem:[#allocation2 + $0x4] sm:$0xf] %v337
        %340 = vst [vmem:[#allocation2 + $0x8] sm:$0xf] %v338
        %v341 = vld [vmem:[#allocation2] sm:$0xc]
        %v342 = vld [vmem:[#allocation2 + $0x4] sm:$0xf]
        %v343 = vld [vmem:[#allocation2 + $0x8] sm:$0x7]
        %v344 = vld [vmem:[#allocation2] sm:$0x8]
        %v345 = vld [vmem:[#allocation2 + $0x8] sm:$0xf]
        %v346 = vld [vmem:[#allocation2 + $0x4] sm:$0xf]
        %v347 = vld [vmem:[#allocation2 + $0x8] sm:$0xf]
        %v348 = vld [vmem:[#allocation2 + $0xc] sm:$0x1]
        %v349 = vld [vmem:[#allocation2 + $0x4] sm:$0xe]
        %v350 = vld [vmem:[#allocation2 + $0xc] sm:$0x3]
        %v354 = vunpack.c.l.b16 %v341
        %v355 = vunpack.c.l.b16 %v342
        %v356 = vunpack.c.l.b16 %v343
        %v357 = vpack.c.b16 %v355, %v354
        %v358 = vpack.c.b16 %v356, %v356
        %v360 = vunpack.c.l.b16 %v344
        %v361 = vpack.c.b16 %v355, %v360
        %vm362 = vsmask.f32 7424
        %v364 = vshrl.u32 %v361, 16
        %v366 = vshll.u32 %v361, 16
        %v368 = vrot.slane %v366, 1
        %v369 = vor.u32 %v364, %v368
        %v371 = vshll.u32 %v358, 16
        %v373 = vrot.slane %v371, 1
        %v374 = vsel %vm362, %v369, %v373
        %v375 = vshrl.u32 %v358, 16
        %v377 = vor.u32 %v375, %v373
        %v379 = vunpack.c.l.b16 %v345
        %v380 = vpack.c.b16 %v379, %v379
        %vm381 = vcmask 1046528
        %v382 = vrot.slane %v361, 1
        %v383 = vrot.slane %v380, 1
        %v384 = vsel %vm381, %v382, %v383
        %v385 = vpack.c.b16 %v379, %v355
        %v387 = vshrl.u32 %v385, 16
        %v389 = vrot.slane %v387, 5
        %v390 = vshll.u32 %v385, 16
        %v392 = vrot.slane %v390, 6
        %v393 = vor.u32 %v389, %v392
        %v397 = vunpack.c.l.b16 %v346
        %v398 = vunpack.c.l.b16 %v347
        %v399 = vunpack.c.l.b16 %v348
        %v400 = vpack.c.b16 %v398, %v397
        %v401 = vpack.c.b16 %v399, %v399
        %vm402 = vcmask 1041408
        %v403 = vrot.slane %v400, 6
        %v404 = vrot.slane %v401, 6
        %v405 = vsel %vm402, %v403, %v404
        %v407 = vunpack.c.l.b16 %v349
        %v408 = vpack.c.b16 %v398, %v407
        %vm409 = vsmask.f32 1280
        %v411 = vshrl.u32 %v408, 16
        %v413 = vrot.slane %v411, 6
        %v414 = vshll.u32 %v408, 16
        %v416 = vrot.slane %v414, 7
        %v417 = vor.u32 %v413, %v416
        %v419 = vshrl.u32 %v401, 16
        %v421 = vrot.slane %v419, 6
        %v422 = vshll.u32 %v401, 16
        %v424 = vrot.slane %v422, 7
        %v425 = vor.u32 %v421, %v424
        %v426 = vsel %vm409, %v417, %v425
        %v428 = vunpack.c.l.b16 %v350
        %v429 = vpack.c.b16 %v428, %v428
        %vm430 = vcmask 1040384
        %v431 = vrot.slane %v408, 7
        %v432 = vrot.slane %v429, 7
        %v433 = vsel %vm430, %v431, %v432
        %v434 = vld [vmem:[#allocation7] sm:$0xf]
        %v435 = vld [vmem:[#allocation7 + $0x4] sm:$0xf]
        %v436 = vld [vmem:[#allocation7 + $0x8] sm:$0xf]
        %v437 = vld [vmem:[#allocation7 + $0xc] sm:$0xf]
        %v438 = vld [vmem:[#allocation7 + $0x10] sm:$0xf]
        %v439 = vld [vmem:[#allocation7 + $0x14] sm:$0xf]
        %v440 = vld [vmem:[#allocation7 + $0x18] sm:$0xf]
        %v441 = vld [vmem:[#allocation7 + $0x1c] sm:$0xf]
        %v442 = vld [vmem:[#allocation7 + $0x20] sm:$0xf]
        %v443 = vld [vmem:[#allocation7 + $0x24] sm:$0xf]
        %v444 = vld [vmem:[#allocation7 + $0x28] sm:$0xf]
        %v445 = vld [vmem:[#allocation7 + $0x2c] sm:$0xf]
        %v446 = vld [vmem:[#allocation7 + $0x30] sm:$0xf]
        %v447 = vld [vmem:[#allocation7 + $0x34] sm:$0xf]
        %v448 = vld [vmem:[#allocation7 + $0x38] sm:$0xf]
        %v449 = vld [vmem:[#allocation7 + $0x3c] sm:$0xf]
        %v450 = vld [vmem:[#allocation7 + $0x40] sm:$0xf]
        %v451 = vld [vmem:[#allocation7 + $0x44] sm:$0xf]
        %v452 = vld [vmem:[#allocation7 + $0x48] sm:$0xf]
        %v453 = vld [vmem:[#allocation7 + $0x4c] sm:$0xf]
        %v454 = vld [vmem:[#allocation7 + $0x50] sm:$0xf]
        %v455 = vld [vmem:[#allocation7 + $0x54] sm:$0xf]
        %v456 = vld [vmem:[#allocation7 + $0x58] sm:$0xf]
        %v457 = vld [vmem:[#allocation7 + $0x5c] sm:$0xf]
        %v458 = vld [vmem:[#allocation7 + $0x60] sm:$0xf]
        %v459 = vld [vmem:[#allocation7 + $0x64] sm:$0xf]
        %v460 = vld [vmem:[#allocation7 + $0x68] sm:$0xf]
        %v461 = vld [vmem:[#allocation7 + $0x6c] sm:$0xf]
        %v462 = vld [vmem:[#allocation7 + $0x70] sm:$0xf]
        %v463 = vld [vmem:[#allocation7 + $0x74] sm:$0xf]
        %v464 = vld [vmem:[#allocation7 + $0x78] sm:$0xf]
        %v465 = vld [vmem:[#allocation7 + $0x7c] sm:$0xf]
        %v466 = vld [vmem:[#allocation7 + $0x80] sm:$0xf]
        %v467 = vld [vmem:[#allocation7 + $0x84] sm:$0xf]
        %v468 = vld [vmem:[#allocation7 + $0x88] sm:$0xf]
        %v469 = vld [vmem:[#allocation7 + $0x8c] sm:$0xf]
        %v470 = vld [vmem:[#allocation7 + $0x90] sm:$0xf]
        %v471 = vld [vmem:[#allocation7 + $0x94] sm:$0xf]
        %v472 = vld [vmem:[#allocation7 + $0x98] sm:$0xf]
        %v473 = vld [vmem:[#allocation7 + $0x9c] sm:$0xf]
        %v474 = vld [vmem:[#allocation7 + $0xa0] sm:$0xf]
        %v475 = vld [vmem:[#allocation7 + $0xa4] sm:$0xf]
        %v476 = vld [vmem:[#allocation7 + $0xa8] sm:$0xf]
        %v477 = vld [vmem:[#allocation7 + $0xac] sm:$0xf]
        %v478 = vld [vmem:[#allocation7 + $0xb0] sm:$0xf]
        %v479 = vld [vmem:[#allocation7 + $0xb4] sm:$0xf]
        %v480 = vld [vmem:[#allocation7 + $0xb8] sm:$0xf]
        %v481 = vld [vmem:[#allocation7 + $0xbc] sm:$0xf]
        %v482 = vld [vmem:[#allocation7 + $0xc0] sm:$0xf]
        %v483 = vld [vmem:[#allocation7 + $0xc4] sm:$0xf]
        %v484 = vld [vmem:[#allocation7 + $0xc8] sm:$0xf]
        %v485 = vld [vmem:[#allocation7 + $0xcc] sm:$0xf]
        %v486 = vld [vmem:[#allocation7 + $0xd0] sm:$0xf]
        %v487 = vld [vmem:[#allocation7 + $0xd4] sm:$0xf]
        %v488 = vld [vmem:[#allocation7 + $0xd8] sm:$0xf]
        %v489 = vld [vmem:[#allocation7 + $0xdc] sm:$0xf]
        %v490 = vld [vmem:[#allocation7 + $0xe0] sm:$0xf]
        %v491 = vld [vmem:[#allocation7 + $0xe4] sm:$0xf]
        %v492 = vld [vmem:[#allocation7 + $0xe8] sm:$0xf]
        %v493 = vld [vmem:[#allocation7 + $0xec] sm:$0xf]
        %v494 = vld [vmem:[#allocation7 + $0xf0] sm:$0xf]
        %v495 = vld [vmem:[#allocation7 + $0xf4] sm:$0xf]
        %v496 = vld [vmem:[#allocation7 + $0xf8] sm:$0xf]
        %v497 = vld [vmem:[#allocation7 + $0xfc] sm:$0xf]
        %v498 = vld [vmem:[#allocation7 + $0x100] sm:$0xf]
        %v499 = vld [vmem:[#allocation7 + $0x104] sm:$0xf]
        %v500 = vld [vmem:[#allocation7 + $0x108] sm:$0xf]
        %v501 = vld [vmem:[#allocation7 + $0x10c] sm:$0xf]
        %v502 = vld [vmem:[#allocation7 + $0x110] sm:$0xf]
        %v503 = vld [vmem:[#allocation7 + $0x114] sm:$0xf]
        %v504 = vld [vmem:[#allocation7 + $0x118] sm:$0xf]
        %v505 = vld [vmem:[#allocation7 + $0x11c] sm:$0xf]
        %v506 = vld [vmem:[#allocation7 + $0x120] sm:$0xf]
        %v507 = vld [vmem:[#allocation7 + $0x124] sm:$0xf]
        %v508 = vld [vmem:[#allocation7 + $0x128] sm:$0xf]
        %v509 = vld [vmem:[#allocation7 + $0x12c] sm:$0xf]
        %v510 = vld [vmem:[#allocation7 + $0x130] sm:$0xf]
        %v511 = vld [vmem:[#allocation7 + $0x134] sm:$0xf]
        %v512 = vld [vmem:[#allocation7 + $0x138] sm:$0xf]
        %v513 = vld [vmem:[#allocation7 + $0x13c] sm:$0xf]
        %v514 = vld [vmem:[#allocation7 + $0x140] sm:$0xf]
        %v515 = vld [vmem:[#allocation7 + $0x144] sm:$0xf]
        %v516 = vld [vmem:[#allocation7 + $0x148] sm:$0xf]
        %v517 = vld [vmem:[#allocation7 + $0x14c] sm:$0xf]
        %v518 = vld [vmem:[#allocation7 + $0x150] sm:$0xf]
        %v519 = vld [vmem:[#allocation7 + $0x154] sm:$0xf]
        %v520 = vld [vmem:[#allocation7 + $0x158] sm:$0xf]
        %v521 = vld [vmem:[#allocation7 + $0x15c] sm:$0xf]
        %v522 = vld [vmem:[#allocation7 + $0x160] sm:$0xf]
        %v523 = vld [vmem:[#allocation7 + $0x164] sm:$0xf]
        %v524 = vld [vmem:[#allocation7 + $0x168] sm:$0xf]
        %v525 = vld [vmem:[#allocation7 + $0x16c] sm:$0xf]
        %v526 = vld [vmem:[#allocation7 + $0x170] sm:$0xf]
        %v527 = vld [vmem:[#allocation7 + $0x174] sm:$0xf]
        %v528 = vld [vmem:[#allocation7 + $0x178] sm:$0xf]
        %v529 = vld [vmem:[#allocation7 + $0x17c] sm:$0xf]
        %v530 = vld [vmem:[#allocation7 + $0x180] sm:$0xf]
        %v531 = vld [vmem:[#allocation7 + $0x184] sm:$0xf]
        %v532 = vld [vmem:[#allocation7 + $0x188] sm:$0xf]
        %v533 = vld [vmem:[#allocation7 + $0x18c] sm:$0xf]
        %v534 = vld [vmem:[#allocation7 + $0x190] sm:$0xf]
        %v535 = vld [vmem:[#allocation7 + $0x194] sm:$0xf]
        %v536 = vld [vmem:[#allocation7 + $0x198] sm:$0xf]
        %v537 = vld [vmem:[#allocation7 + $0x19c] sm:$0xf]
        %v538 = vld [vmem:[#allocation7 + $0x1a0] sm:$0xf]
        %v539 = vld [vmem:[#allocation7 + $0x1a4] sm:$0xf]
        %v540 = vld [vmem:[#allocation7 + $0x1a8] sm:$0xf]
        %v541 = vld [vmem:[#allocation7 + $0x1ac] sm:$0xf]
        %v542 = vld [vmem:[#allocation7 + $0x1b0] sm:$0xf]
        %v543 = vld [vmem:[#allocation7 + $0x1b4] sm:$0xf]
        %v544 = vld [vmem:[#allocation7 + $0x1b8] sm:$0xf]
        %v545 = vld [vmem:[#allocation7 + $0x1bc] sm:$0xf]
        %vm546 = vsmask.f32 5376
        %v548 = vshrl.u32 %v357, 16
        %v550 = vrot.slane %v548, 2
        %v551 = vshll.u32 %v357, 16
        %v553 = vrot.slane %v551, 3
        %v554 = vor.u32 %v550, %v553
        %v555 = vrot.slane %v375, 2
        %v556 = vrot.slane %v371, 3
        %v557 = vor.u32 %v555, %v556
        %v558 = vsel %vm546, %v554, %v557
        %v560 = vshrl.u32 %v374, 16
        %v562 = vrot.slane %v560, 2
        %v563 = vshll.u32 %v374, 16
        %v565 = vrot.slane %v563, 3
        %v566 = vor.u32 %v562, %v565
        %v568 = vshrl.u32 %v377, 16
        %v570 = vrot.slane %v568, 2
        %v571 = vshll.u32 %v377, 16
        %v573 = vrot.slane %v571, 3
        %v574 = vor.u32 %v570, %v573
        %v575 = vsel %vm546, %v566, %v574
        %v577 = vshrl.u32 %v384, 16
        %v579 = vrot.slane %v577, 2
        %v580 = vshll.u32 %v384, 16
        %v582 = vrot.slane %v580, 3
        %v583 = vor.u32 %v579, %v582
        %v585 = vshrl.u32 %v383, 16
        %v587 = vrot.slane %v585, 2
        %v588 = vshll.u32 %v383, 16
        %v590 = vrot.slane %v588, 3
        %v591 = vor.u32 %v587, %v590
        %v592 = vsel %vm546, %v583, %v591
        %v594 = vshrl.u32 %v393, 16
        %v596 = vrot.slane %v594, 2
        %v597 = vshll.u32 %v393, 16
        %v599 = vrot.slane %v597, 3
        %v600 = vor.u32 %v596, %v599
        %v601 = vsel %vm546, %v600, %v600
        %v603 = vshrl.u32 %v403, 16
        %v605 = vrot.slane %v603, 2
        %v606 = vshll.u32 %v403, 16
        %v608 = vrot.slane %v606, 3
        %v609 = vor.u32 %v605, %v608
        %v611 = vshrl.u32 %v405, 16
        %v613 = vrot.slane %v611, 2
        %v614 = vshll.u32 %v405, 16
        %v616 = vrot.slane %v614, 3
        %v617 = vor.u32 %v613, %v616
        %v618 = vsel %vm546, %v609, %v617
        %v620 = vshrl.u32 %v417, 16
        %v622 = vrot.slane %v620, 2
        %v623 = vshll.u32 %v417, 16
        %v625 = vrot.slane %v623, 3
        %v626 = vor.u32 %v622, %v625
        %v628 = vshrl.u32 %v426, 16
        %v630 = vrot.slane %v628, 2
        %v631 = vshll.u32 %v426, 16
        %v633 = vrot.slane %v631, 3
        %v634 = vor.u32 %v630, %v633
        %v635 = vsel %vm546, %v626, %v634
        %v637 = vshrl.u32 %v431, 16
        %v639 = vrot.slane %v637, 2
        %v640 = vshll.u32 %v431, 16
        %v642 = vrot.slane %v640, 3
        %v643 = vor.u32 %v639, %v642
        %v645 = vshrl.u32 %v433, 16
        %v647 = vrot.slane %v645, 2
        %v648 = vshll.u32 %v433, 16
        %v650 = vrot.slane %v648, 3
        %v651 = vor.u32 %v647, %v650
        %v652 = vsel %vm546, %v643, %v651
        %v772 = vunpack.c.l.b16 %v434
        %v773 = vunpack.c.l.b16 %v435
        %v774 = vunpack.c.l.b16 %v436
        %v775 = vunpack.c.l.b16 %v437
        %v776 = vunpack.c.l.b16 %v438
        %v777 = vunpack.c.l.b16 %v439
        %v778 = vunpack.c.l.b16 %v440
        %v779 = vunpack.c.l.b16 %v441
        %v780 = vunpack.c.l.b16 %v442
        %v781 = vunpack.c.l.b16 %v443
        %v782 = vunpack.c.l.b16 %v444
        %v783 = vunpack.c.l.b16 %v445
        %v784 = vunpack.c.l.b16 %v446
        %v785 = vunpack.c.l.b16 %v447
        %v786 = vunpack.c.l.b16 %v448
        %v787 = vunpack.c.l.b16 %v449
        %v788 = vunpack.c.l.b16 %v450
        %v789 = vunpack.c.l.b16 %v451
        %v790 = vunpack.c.l.b16 %v452
        %v791 = vunpack.c.l.b16 %v453
        %v792 = vunpack.c.l.b16 %v454
        %v793 = vunpack.c.l.b16 %v455
        %v794 = vunpack.c.l.b16 %v456
        %v795 = vunpack.c.l.b16 %v457
        %v796 = vunpack.c.l.b16 %v458
        %v797 = vunpack.c.l.b16 %v459
        %v798 = vunpack.c.l.b16 %v460
        %v799 = vunpack.c.l.b16 %v461
        %v800 = vunpack.c.l.b16 %v462
        %v801 = vunpack.c.l.b16 %v463
        %v802 = vunpack.c.l.b16 %v464
        %v803 = vunpack.c.l.b16 %v465
        %v804 = vunpack.c.l.b16 %v466
        %v805 = vunpack.c.l.b16 %v467
        %v806 = vunpack.c.l.b16 %v468
        %v807 = vunpack.c.l.b16 %v469
        %v808 = vunpack.c.l.b16 %v470
        %v809 = vunpack.c.l.b16 %v471
        %v810 = vunpack.c.l.b16 %v472
        %v811 = vunpack.c.l.b16 %v473
        %v812 = vunpack.c.l.b16 %v474
        %v813 = vunpack.c.l.b16 %v475
        %v814 = vunpack.c.l.b16 %v476
        %v815 = vunpack.c.l.b16 %v477
        %v816 = vunpack.c.l.b16 %v478
        %v817 = vunpack.c.l.b16 %v479
        %v818 = vunpack.c.l.b16 %v480
        %v819 = vunpack.c.l.b16 %v481
        %v820 = vunpack.c.l.b16 %v482
        %v821 = vunpack.c.l.b16 %v483
        %v822 = vunpack.c.l.b16 %v484
        %v823 = vunpack.c.l.b16 %v485
        %v824 = vunpack.c.l.b16 %v486
        %v825 = vunpack.c.l.b16 %v487
        %v826 = vunpack.c.l.b16 %v488
        %v827 = vunpack.c.l.b16 %v489
        %v828 = vunpack.c.l.b16 %v490
        %v829 = vunpack.c.l.b16 %v491
        %v830 = vunpack.c.l.b16 %v492
        %v831 = vunpack.c.l.b16 %v493
        %v832 = vunpack.c.l.b16 %v494
        %v833 = vunpack.c.l.b16 %v495
        %v834 = vunpack.c.l.b16 %v496
        %v835 = vunpack.c.l.b16 %v497
        %v836 = vunpack.c.l.b16 %v498
        %v837 = vunpack.c.l.b16 %v499
        %v838 = vunpack.c.l.b16 %v500
        %v839 = vunpack.c.l.b16 %v501
        %v840 = vunpack.c.l.b16 %v502
        %v841 = vunpack.c.l.b16 %v503
        %v842 = vunpack.c.l.b16 %v504
        %v843 = vunpack.c.l.b16 %v505
        %v844 = vunpack.c.l.b16 %v506
        %v845 = vunpack.c.l.b16 %v507
        %v846 = vunpack.c.l.b16 %v508
        %v847 = vunpack.c.l.b16 %v509
        %v848 = vunpack.c.l.b16 %v510
        %v849 = vunpack.c.l.b16 %v511
        %v850 = vunpack.c.l.b16 %v512
        %v851 = vunpack.c.l.b16 %v513
        %v852 = vunpack.c.l.b16 %v514
        %v853 = vunpack.c.l.b16 %v515
        %v854 = vunpack.c.l.b16 %v516
        %v855 = vunpack.c.l.b16 %v517
        %v856 = vunpack.c.l.b16 %v518
        %v857 = vunpack.c.l.b16 %v519
        %v858 = vunpack.c.l.b16 %v520
        %v859 = vunpack.c.l.b16 %v521
        %v860 = vunpack.c.l.b16 %v522
        %v861 = vunpack.c.l.b16 %v523
        %v862 = vunpack.c.l.b16 %v524
        %v863 = vunpack.c.l.b16 %v525
        %v864 = vunpack.c.l.b16 %v526
        %v865 = vunpack.c.l.b16 %v527
        %v866 = vunpack.c.l.b16 %v528
        %v867 = vunpack.c.l.b16 %v529
        %v868 = vunpack.c.l.b16 %v530
        %v869 = vunpack.c.l.b16 %v531
        %v870 = vunpack.c.l.b16 %v532
        %v871 = vunpack.c.l.b16 %v533
        %v872 = vunpack.c.l.b16 %v534
        %v873 = vunpack.c.l.b16 %v535
        %v874 = vunpack.c.l.b16 %v536
        %v875 = vunpack.c.l.b16 %v537
        %v876 = vunpack.c.l.b16 %v538
        %v877 = vunpack.c.l.b16 %v539
        %v878 = vunpack.c.l.b16 %v540
        %v879 = vunpack.c.l.b16 %v541
        %v880 = vunpack.c.l.b16 %v542
        %v881 = vunpack.c.l.b16 %v543
        %v882 = vunpack.c.l.b16 %v544
        %v883 = vunpack.c.l.b16 %v545
        %v884 = vpack.c.b16 %v773, %v772
        %v885 = vpack.c.b16 %v775, %v774
        %v886 = vpack.c.b16 %v777, %v776
        %v887 = vpack.c.b16 %v779, %v778
        %v888 = vpack.c.b16 %v781, %v780
        %v889 = vpack.c.b16 %v783, %v782
        %v890 = vpack.c.b16 %v785, %v784
        %v891 = vpack.c.b16 %v787, %v786
        %v892 = vpack.c.b16 %v789, %v788
        %v893 = vpack.c.b16 %v791, %v790
        %v894 = vpack.c.b16 %v793, %v792
        %v895 = vpack.c.b16 %v795, %v794
        %v896 = vpack.c.b16 %v797, %v796
        %v897 = vpack.c.b16 %v799, %v798
        %v898 = vpack.c.b16 %v801, %v800
        %v899 = vpack.c.b16 %v803, %v802
        %v900 = vpack.c.b16 %v805, %v804
        %v901 = vpack.c.b16 %v807, %v806
        %v902 = vpack.c.b16 %v809, %v808
        %v903 = vpack.c.b16 %v811, %v810
        %v904 = vpack.c.b16 %v813, %v812
        %v905 = vpack.c.b16 %v815, %v814
        %v906 = vpack.c.b16 %v817, %v816
        %v907 = vpack.c.b16 %v819, %v818
        %v908 = vpack.c.b16 %v821, %v820
        %v909 = vpack.c.b16 %v823, %v822
        %v910 = vpack.c.b16 %v825, %v824
        %v911 = vpack.c.b16 %v827, %v826
        %v912 = vpack.c.b16 %v829, %v828
        %v913 = vpack.c.b16 %v831, %v830
        %v914 = vpack.c.b16 %v833, %v832
        %v915 = vpack.c.b16 %v835, %v834
        %v916 = vpack.c.b16 %v837, %v836
        %v917 = vpack.c.b16 %v839, %v838
        %v918 = vpack.c.b16 %v841, %v840
        %v919 = vpack.c.b16 %v843, %v842
        %v920 = vpack.c.b16 %v845, %v844
        %v921 = vpack.c.b16 %v847, %v846
        %v922 = vpack.c.b16 %v849, %v848
        %v923 = vpack.c.b16 %v851, %v850
        %v924 = vpack.c.b16 %v853, %v852
        %v925 = vpack.c.b16 %v855, %v854
        %v926 = vpack.c.b16 %v857, %v856
        %v927 = vpack.c.b16 %v859, %v858
        %v928 = vpack.c.b16 %v861, %v860
        %v929 = vpack.c.b16 %v863, %v862
        %v930 = vpack.c.b16 %v865, %v864
        %v931 = vpack.c.b16 %v867, %v866
        %v932 = vpack.c.b16 %v869, %v868
        %v933 = vpack.c.b16 %v871, %v870
        %v934 = vpack.c.b16 %v873, %v872
        %v935 = vpack.c.b16 %v875, %v874
        %v936 = vpack.c.b16 %v877, %v876
        %v937 = vpack.c.b16 %v879, %v878
        %v938 = vpack.c.b16 %v881, %v880
        %v939 = vpack.c.b16 %v883, %v882
        %996 = vmatpush.bf16.msra.mxu0 %v891
        %997 = vmatpush.bf16.msra.mxu0 %v890
        %998 = vmatpush.bf16.msra.mxu0 %v889
        %999 = vmatpush.bf16.msra.mxu0 %v888
        %1000 = vmatpush.bf16.msra.mxu0 %v887
        %1001 = vmatpush.bf16.msra.mxu0 %v886
        %1002 = vmatpush.bf16.msra.mxu0 %v885
        %1003 = vmatpush.bf16.msra.mxu0 %v884
        %1004 = vmatmul.bf16.gmra.mxu0 %v558
        %v1005 = vpop.f32.mrf.mxu0
        %v1006 = vadd.f32 0.0, %v1005
        %v1007 = vpop.f32.mrf.mxu0
        %v1008 = vadd.f32 0.0, %v1007
        %1009 = vdwg.mxu0
        %1010 = vmatpush.bf16.msra.mxu0 %v899
        %1011 = vmatpush.bf16.msra.mxu0 %v898
        %1012 = vmatpush.bf16.msra.mxu0 %v897
        %1013 = vmatpush.bf16.msra.mxu0 %v896
        %1014 = vmatpush.bf16.msra.mxu0 %v895
        %1015 = vmatpush.bf16.msra.mxu0 %v894
        %1016 = vmatpush.bf16.msra.mxu0 %v893
        %1017 = vmatpush.bf16.msra.mxu0 %v892
        %1018 = vmatmul.bf16.gmra.mxu0 %v575
        %v1019 = vpop.f32.mrf.mxu0
        %v1020 = vadd.f32 %v1006, %v1019
        %v1021 = vpop.f32.mrf.mxu0
        %v1022 = vadd.f32 %v1008, %v1021
        %1023 = vdwg.mxu0
        %1024 = vmatpush.bf16.msra.mxu0 %v907
        %1025 = vmatpush.bf16.msra.mxu0 %v906
        %1026 = vmatpush.bf16.msra.mxu0 %v905
        %1027 = vmatpush.bf16.msra.mxu0 %v904
        %1028 = vmatpush.bf16.msra.mxu0 %v903
        %1029 = vmatpush.bf16.msra.mxu0 %v902
        %1030 = vmatpush.bf16.msra.mxu0 %v901
        %1031 = vmatpush.bf16.msra.mxu0 %v900
        %1032 = vmatmul.bf16.gmra.mxu0 %v592
        %v1033 = vpop.f32.mrf.mxu0
        %v1034 = vadd.f32 %v1020, %v1033
        %v1035 = vpop.f32.mrf.mxu0
        %v1036 = vadd.f32 %v1022, %v1035
        %1037 = vdwg.mxu0
        %1038 = vmatpush.bf16.msra.mxu0 %v915
        %1039 = vmatpush.bf16.msra.mxu0 %v914
        %1040 = vmatpush.bf16.msra.mxu0 %v913
        %1041 = vmatpush.bf16.msra.mxu0 %v912
        %1042 = vmatpush.bf16.msra.mxu0 %v911
        %1043 = vmatpush.bf16.msra.mxu0 %v910
        %1044 = vmatpush.bf16.msra.mxu0 %v909
        %1045 = vmatpush.bf16.msra.mxu0 %v908
        %1046 = vmatmul.bf16.gmra.mxu0 %v601
        %v1047 = vpop.f32.mrf.mxu0
        %v1048 = vadd.f32 %v1034, %v1047
        %v1049 = vpop.f32.mrf.mxu0
        %v1050 = vadd.f32 %v1036, %v1049
        %1051 = vdwg.mxu0
        %1052 = vmatpush.bf16.msra.mxu0 %v923
        %1053 = vmatpush.bf16.msra.mxu0 %v922
        %1054 = vmatpush.bf16.msra.mxu0 %v921
        %1055 = vmatpush.bf16.msra.mxu0 %v920
        %1056 = vmatpush.bf16.msra.mxu0 %v919
        %1057 = vmatpush.bf16.msra.mxu0 %v918
        %1058 = vmatpush.bf16.msra.mxu0 %v917
        %1059 = vmatpush.bf16.msra.mxu0 %v916
        %1060 = vmatmul.bf16.gmra.mxu0 %v618
        %v1061 = vpop.f32.mrf.mxu0
        %v1062 = vadd.f32 %v1048, %v1061
        %v1063 = vpop.f32.mrf.mxu0
        %v1064 = vadd.f32 %v1050, %v1063
        %1065 = vdwg.mxu0
        %1066 = vmatpush.bf16.msra.mxu0 %v931
        %1067 = vmatpush.bf16.msra.mxu0 %v930
        %1068 = vmatpush.bf16.msra.mxu0 %v929
        %1069 = vmatpush.bf16.msra.mxu0 %v928
        %1070 = vmatpush.bf16.msra.mxu0 %v927
        %1071 = vmatpush.bf16.msra.mxu0 %v926
        %1072 = vmatpush.bf16.msra.mxu0 %v925
        %1073 = vmatpush.bf16.msra.mxu0 %v924
        %1074 = vmatmul.bf16.gmra.mxu0 %v635
        %v1075 = vpop.f32.mrf.mxu0
        %v1076 = vadd.f32 %v1062, %v1075
        %v1077 = vpop.f32.mrf.mxu0
        %v1078 = vadd.f32 %v1064, %v1077
        %1079 = vdwg.mxu0
        %1080 = vmatpush.bf16.msra.mxu0 %v939
        %1081 = vmatpush.bf16.msra.mxu0 %v938
        %1082 = vmatpush.bf16.msra.mxu0 %v937
        %1083 = vmatpush.bf16.msra.mxu0 %v936
        %1084 = vmatpush.bf16.msra.mxu0 %v935
        %1085 = vmatpush.bf16.msra.mxu0 %v934
        %1086 = vmatpush.bf16.msra.mxu0 %v933
        %1087 = vmatpush.bf16.msra.mxu0 %v932
        %1088 = vmatmul.bf16.gmra.mxu0 %v652
        %v1089 = vpop.f32.mrf.mxu0
        %v1090 = vadd.f32 %v1076, %v1089
        %v1091 = vpop.f32.mrf.mxu0
        %v1092 = vadd.f32 %v1078, %v1091
        %1093 = vdwg.mxu0
        %v1094 = vld [vmem:[%s3] sm:$0x1]
        %v1096 = vperm.slane %v1094, 0
        %v1098 = vmul.f32 %v1090, %v1096
        %v1099 = vmul.f32 %v1092, %v1096
        %v1100 = vld [vmem:[%s4] sm:$0x1]
        %v1102 = vperm.slane %v1100, 0
        %v1104 = vadd.f32 %v1098, %v1102
        %v1105 = vadd.f32 %v1099, %v1102
        %v1106 = vmax.f32 %v1104, 0.0
        %v1107 = vmax.f32 %v1105, 0.0
        %v1108 = vpack.c.bf16 %v1106, %v1106
        %v1109 = vpack.c.bf16 %v1107, %v1107
        %1110 = vst [vmem:[#allocation3 + $0x4] sm:$0xf] %v1108
        %1111 = vst [vmem:[#allocation3 + $0x8] sm:$0xf] %v1109
        %v1112 = vld [vmem:[#allocation3] sm:$0xc]
        %v1113 = vld [vmem:[#allocation3 + $0x4] sm:$0xf]
        %v1114 = vld [vmem:[#allocation3 + $0x8] sm:$0x7]
        %v1115 = vld [vmem:[#allocation3] sm:$0x8]
        %v1116 = vld [vmem:[#allocation3 + $0x8] sm:$0xf]
        %v1117 = vld [vmem:[#allocation3 + $0x4] sm:$0xf]
        %v1118 = vld [vmem:[#allocation3 + $0x8] sm:$0xf]
        %v1119 = vld [vmem:[#allocation3 + $0xc] sm:$0x1]
        %v1120 = vld [vmem:[#allocation3 + $0x4] sm:$0xe]
        %v1121 = vld [vmem:[#allocation3 + $0xc] sm:$0x3]
        %v1125 = vunpack.c.l.b16 %v1112
        %v1126 = vunpack.c.l.b16 %v1113
        %v1127 = vunpack.c.l.b16 %v1114
        %v1128 = vpack.c.b16 %v1126, %v1125
        %v1129 = vpack.c.b16 %v1127, %v1127
        %v1131 = vunpack.c.l.b16 %v1115
        %v1132 = vpack.c.b16 %v1126, %v1131
        %v1134 = vshrl.u32 %v1132, 16
        %v1136 = vshll.u32 %v1132, 16
        %v1138 = vrot.slane %v1136, 1
        %v1139 = vor.u32 %v1134, %v1138
        %v1141 = vshll.u32 %v1129, 16
        %v1143 = vrot.slane %v1141, 1
        %v1144 = vsel %vm362, %v1139, %v1143
        %v1145 = vshrl.u32 %v1129, 16
        %v1147 = vor.u32 %v1145, %v1143
        %v1149 = vunpack.c.l.b16 %v1116
        %v1150 = vpack.c.b16 %v1149, %v1149
        %v1151 = vrot.slane %v1132, 1
        %v1152 = vrot.slane %v1150, 1
        %v1153 = vsel %vm381, %v1151, %v1152
        %v1154 = vpack.c.b16 %v1149, %v1126
        %v1156 = vshrl.u32 %v1154, 16
        %v1158 = vrot.slane %v1156, 5
        %v1159 = vshll.u32 %v1154, 16
        %v1161 = vrot.slane %v1159, 6
        %v1162 = vor.u32 %v1158, %v1161
        %v1166 = vunpack.c.l.b16 %v1117
        %v1167 = vunpack.c.l.b16 %v1118
        %v1168 = vunpack.c.l.b16 %v1119
        %v1169 = vpack.c.b16 %v1167, %v1166
        %v1170 = vpack.c.b16 %v1168, %v1168
        %v1171 = vrot.slane %v1169, 6
        %v1172 = vrot.slane %v1170, 6
        %v1173 = vsel %vm402, %v1171, %v1172
        %v1175 = vunpack.c.l.b16 %v1120
        %v1176 = vpack.c.b16 %v1167, %v1175
        %v1178 = vshrl.u32 %v1176, 16
        %v1180 = vrot.slane %v1178, 6
        %v1181 = vshll.u32 %v1176, 16
        %v1183 = vrot.slane %v1181, 7
        %v1184 = vor.u32 %v1180, %v1183
        %v1186 = vshrl.u32 %v1170, 16
        %v1188 = vrot.slane %v1186, 6
        %v1189 = vshll.u32 %v1170, 16
        %v1191 = vrot.slane %v1189, 7
        %v1192 = vor.u32 %v1188, %v1191
        %v1193 = vsel %vm409, %v1184, %v1192
        %v1195 = vunpack.c.l.b16 %v1121
        %v1196 = vpack.c.b16 %v1195, %v1195
        %v1197 = vrot.slane %v1176, 7
        %v1198 = vrot.slane %v1196, 7
        %v1199 = vsel %vm430, %v1197, %v1198
        %v1200 = vld [vmem:[#allocation9] sm:$0xf]
        %v1201 = vld [vmem:[#allocation9 + $0x4] sm:$0xf]
        %v1202 = vld [vmem:[#allocation9 + $0x8] sm:$0xf]
        %v1203 = vld [vmem:[#allocation9 + $0xc] sm:$0xf]
        %v1204 = vld [vmem:[#allocation9 + $0x10] sm:$0xf]
        %v1205 = vld [vmem:[#allocation9 + $0x14] sm:$0xf]
        %v1206 = vld [vmem:[#allocation9 + $0x18] sm:$0xf]
        %v1207 = vld [vmem:[#allocation9 + $0x1c] sm:$0xf]
        %v1208 = vld [vmem:[#allocation9 + $0x20] sm:$0xf]
        %v1209 = vld [vmem:[#allocation9 + $0x24] sm:$0xf]
        %v1210 = vld [vmem:[#allocation9 + $0x28] sm:$0xf]
        %v1211 = vld [vmem:[#allocation9 + $0x2c] sm:$0xf]
        %v1212 = vld [vmem:[#allocation9 + $0x30] sm:$0xf]
        %v1213 = vld [vmem:[#allocation9 + $0x34] sm:$0xf]
        %v1214 = vld [vmem:[#allocation9 + $0x38] sm:$0xf]
        %v1215 = vld [vmem:[#allocation9 + $0x3c] sm:$0xf]
        %v1216 = vld [vmem:[#allocation9 + $0x40] sm:$0xf]
        %v1217 = vld [vmem:[#allocation9 + $0x44] sm:$0xf]
        %v1218 = vld [vmem:[#allocation9 + $0x48] sm:$0xf]
        %v1219 = vld [vmem:[#allocation9 + $0x4c] sm:$0xf]
        %v1220 = vld [vmem:[#allocation9 + $0x50] sm:$0xf]
        %v1221 = vld [vmem:[#allocation9 + $0x54] sm:$0xf]
        %v1222 = vld [vmem:[#allocation9 + $0x58] sm:$0xf]
        %v1223 = vld [vmem:[#allocation9 + $0x5c] sm:$0xf]
        %v1224 = vld [vmem:[#allocation9 + $0x60] sm:$0xf]
        %v1225 = vld [vmem:[#allocation9 + $0x64] sm:$0xf]
        %v1226 = vld [vmem:[#allocation9 + $0x68] sm:$0xf]
        %v1227 = vld [vmem:[#allocation9 + $0x6c] sm:$0xf]
        %v1228 = vld [vmem:[#allocation9 + $0x70] sm:$0xf]
        %v1229 = vld [vmem:[#allocation9 + $0x74] sm:$0xf]
        %v1230 = vld [vmem:[#allocation9 + $0x78] sm:$0xf]
        %v1231 = vld [vmem:[#allocation9 + $0x7c] sm:$0xf]
        %v1232 = vld [vmem:[#allocation9 + $0x80] sm:$0xf]
        %v1233 = vld [vmem:[#allocation9 + $0x84] sm:$0xf]
        %v1234 = vld [vmem:[#allocation9 + $0x88] sm:$0xf]
        %v1235 = vld [vmem:[#allocation9 + $0x8c] sm:$0xf]
        %v1236 = vld [vmem:[#allocation9 + $0x90] sm:$0xf]
        %v1237 = vld [vmem:[#allocation9 + $0x94] sm:$0xf]
        %v1238 = vld [vmem:[#allocation9 + $0x98] sm:$0xf]
        %v1239 = vld [vmem:[#allocation9 + $0x9c] sm:$0xf]
        %v1240 = vld [vmem:[#allocation9 + $0xa0] sm:$0xf]
        %v1241 = vld [vmem:[#allocation9 + $0xa4] sm:$0xf]
        %v1242 = vld [vmem:[#allocation9 + $0xa8] sm:$0xf]
        %v1243 = vld [vmem:[#allocation9 + $0xac] sm:$0xf]
        %v1244 = vld [vmem:[#allocation9 + $0xb0] sm:$0xf]
        %v1245 = vld [vmem:[#allocation9 + $0xb4] sm:$0xf]
        %v1246 = vld [vmem:[#allocation9 + $0xb8] sm:$0xf]
        %v1247 = vld [vmem:[#allocation9 + $0xbc] sm:$0xf]
        %v1248 = vld [vmem:[#allocation9 + $0xc0] sm:$0xf]
        %v1249 = vld [vmem:[#allocation9 + $0xc4] sm:$0xf]
        %v1250 = vld [vmem:[#allocation9 + $0xc8] sm:$0xf]
        %v1251 = vld [vmem:[#allocation9 + $0xcc] sm:$0xf]
        %v1252 = vld [vmem:[#allocation9 + $0xd0] sm:$0xf]
        %v1253 = vld [vmem:[#allocation9 + $0xd4] sm:$0xf]
        %v1254 = vld [vmem:[#allocation9 + $0xd8] sm:$0xf]
        %v1255 = vld [vmem:[#allocation9 + $0xdc] sm:$0xf]
        %v1256 = vld [vmem:[#allocation9 + $0xe0] sm:$0xf]
        %v1257 = vld [vmem:[#allocation9 + $0xe4] sm:$0xf]
        %v1258 = vld [vmem:[#allocation9 + $0xe8] sm:$0xf]
        %v1259 = vld [vmem:[#allocation9 + $0xec] sm:$0xf]
        %v1260 = vld [vmem:[#allocation9 + $0xf0] sm:$0xf]
        %v1261 = vld [vmem:[#allocation9 + $0xf4] sm:$0xf]
        %v1262 = vld [vmem:[#allocation9 + $0xf8] sm:$0xf]
        %v1263 = vld [vmem:[#allocation9 + $0xfc] sm:$0xf]
        %v1264 = vld [vmem:[#allocation9 + $0x100] sm:$0xf]
        %v1265 = vld [vmem:[#allocation9 + $0x104] sm:$0xf]
        %v1266 = vld [vmem:[#allocation9 + $0x108] sm:$0xf]
        %v1267 = vld [vmem:[#allocation9 + $0x10c] sm:$0xf]
        %v1268 = vld [vmem:[#allocation9 + $0x110] sm:$0xf]
        %v1269 = vld [vmem:[#allocation9 + $0x114] sm:$0xf]
        %v1270 = vld [vmem:[#allocation9 + $0x118] sm:$0xf]
        %v1271 = vld [vmem:[#allocation9 + $0x11c] sm:$0xf]
        %v1272 = vld [vmem:[#allocation9 + $0x120] sm:$0xf]
        %v1273 = vld [vmem:[#allocation9 + $0x124] sm:$0xf]
        %v1274 = vld [vmem:[#allocation9 + $0x128] sm:$0xf]
        %v1275 = vld [vmem:[#allocation9 + $0x12c] sm:$0xf]
        %v1276 = vld [vmem:[#allocation9 + $0x130] sm:$0xf]
        %v1277 = vld [vmem:[#allocation9 + $0x134] sm:$0xf]
        %v1278 = vld [vmem:[#allocation9 + $0x138] sm:$0xf]
        %v1279 = vld [vmem:[#allocation9 + $0x13c] sm:$0xf]
        %v1280 = vld [vmem:[#allocation9 + $0x140] sm:$0xf]
        %v1281 = vld [vmem:[#allocation9 + $0x144] sm:$0xf]
        %v1282 = vld [vmem:[#allocation9 + $0x148] sm:$0xf]
        %v1283 = vld [vmem:[#allocation9 + $0x14c] sm:$0xf]
        %v1284 = vld [vmem:[#allocation9 + $0x150] sm:$0xf]
        %v1285 = vld [vmem:[#allocation9 + $0x154] sm:$0xf]
        %v1286 = vld [vmem:[#allocation9 + $0x158] sm:$0xf]
        %v1287 = vld [vmem:[#allocation9 + $0x15c] sm:$0xf]
        %v1288 = vld [vmem:[#allocation9 + $0x160] sm:$0xf]
        %v1289 = vld [vmem:[#allocation9 + $0x164] sm:$0xf]
        %v1290 = vld [vmem:[#allocation9 + $0x168] sm:$0xf]
        %v1291 = vld [vmem:[#allocation9 + $0x16c] sm:$0xf]
        %v1292 = vld [vmem:[#allocation9 + $0x170] sm:$0xf]
        %v1293 = vld [vmem:[#allocation9 + $0x174] sm:$0xf]
        %v1294 = vld [vmem:[#allocation9 + $0x178] sm:$0xf]
        %v1295 = vld [vmem:[#allocation9 + $0x17c] sm:$0xf]
        %v1296 = vld [vmem:[#allocation9 + $0x180] sm:$0xf]
        %v1297 = vld [vmem:[#allocation9 + $0x184] sm:$0xf]
        %v1298 = vld [vmem:[#allocation9 + $0x188] sm:$0xf]
        %v1299 = vld [vmem:[#allocation9 + $0x18c] sm:$0xf]
        %v1300 = vld [vmem:[#allocation9 + $0x190] sm:$0xf]
        %v1301 = vld [vmem:[#allocation9 + $0x194] sm:$0xf]
        %v1302 = vld [vmem:[#allocation9 + $0x198] sm:$0xf]
        %v1303 = vld [vmem:[#allocation9 + $0x19c] sm:$0xf]
        %v1304 = vld [vmem:[#allocation9 + $0x1a0] sm:$0xf]
        %v1305 = vld [vmem:[#allocation9 + $0x1a4] sm:$0xf]
        %v1306 = vld [vmem:[#allocation9 + $0x1a8] sm:$0xf]
        %v1307 = vld [vmem:[#allocation9 + $0x1ac] sm:$0xf]
        %v1308 = vld [vmem:[#allocation9 + $0x1b0] sm:$0xf]
        %v1309 = vld [vmem:[#allocation9 + $0x1b4] sm:$0xf]
        %v1310 = vld [vmem:[#allocation9 + $0x1b8] sm:$0xf]
        %v1311 = vld [vmem:[#allocation9 + $0x1bc] sm:$0xf]
        %v1313 = vshrl.u32 %v1128, 16
        %v1315 = vrot.slane %v1313, 2
        %v1316 = vshll.u32 %v1128, 16
        %v1318 = vrot.slane %v1316, 3
        %v1319 = vor.u32 %v1315, %v1318
        %v1320 = vrot.slane %v1145, 2
        %v1321 = vrot.slane %v1141, 3
        %v1322 = vor.u32 %v1320, %v1321
        %v1323 = vsel %vm546, %v1319, %v1322
        %v1325 = vshrl.u32 %v1144, 16
        %v1327 = vrot.slane %v1325, 2
        %v1328 = vshll.u32 %v1144, 16
        %v1330 = vrot.slane %v1328, 3
        %v1331 = vor.u32 %v1327, %v1330
        %v1333 = vshrl.u32 %v1147, 16
        %v1335 = vrot.slane %v1333, 2
        %v1336 = vshll.u32 %v1147, 16
        %v1338 = vrot.slane %v1336, 3
        %v1339 = vor.u32 %v1335, %v1338
        %v1340 = vsel %vm546, %v1331, %v1339
        %v1342 = vshrl.u32 %v1153, 16
        %v1344 = vrot.slane %v1342, 2
        %v1345 = vshll.u32 %v1153, 16
        %v1347 = vrot.slane %v1345, 3
        %v1348 = vor.u32 %v1344, %v1347
        %v1350 = vshrl.u32 %v1152, 16
        %v1352 = vrot.slane %v1350, 2
        %v1353 = vshll.u32 %v1152, 16
        %v1355 = vrot.slane %v1353, 3
        %v1356 = vor.u32 %v1352, %v1355
        %v1357 = vsel %vm546, %v1348, %v1356
        %v1359 = vshrl.u32 %v1162, 16
        %v1361 = vrot.slane %v1359, 2
        %v1362 = vshll.u32 %v1162, 16
        %v1364 = vrot.slane %v1362, 3
        %v1365 = vor.u32 %v1361, %v1364
        %v1366 = vsel %vm546, %v1365, %v1365
        %v1368 = vshrl.u32 %v1171, 16
        %v1370 = vrot.slane %v1368, 2
        %v1371 = vshll.u32 %v1171, 16
        %v1373 = vrot.slane %v1371, 3
        %v1374 = vor.u32 %v1370, %v1373
        %v1376 = vshrl.u32 %v1173, 16
        %v1378 = vrot.slane %v1376, 2
        %v1379 = vshll.u32 %v1173, 16
        %v1381 = vrot.slane %v1379, 3
        %v1382 = vor.u32 %v1378, %v1381
        %v1383 = vsel %vm546, %v1374, %v1382
        %v1385 = vshrl.u32 %v1184, 16
        %v1387 = vrot.slane %v1385, 2
        %v1388 = vshll.u32 %v1184, 16
        %v1390 = vrot.slane %v1388, 3
        %v1391 = vor.u32 %v1387, %v1390
        %v1393 = vshrl.u32 %v1193, 16
        %v1395 = vrot.slane %v1393, 2
        %v1396 = vshll.u32 %v1193, 16
        %v1398 = vrot.slane %v1396, 3
        %v1399 = vor.u32 %v1395, %v1398
        %v1400 = vsel %vm546, %v1391, %v1399
        %v1402 = vshrl.u32 %v1197, 16
        %v1404 = vrot.slane %v1402, 2
        %v1405 = vshll.u32 %v1197, 16
        %v1407 = vrot.slane %v1405, 3
        %v1408 = vor.u32 %v1404, %v1407
        %v1410 = vshrl.u32 %v1199, 16
        %v1412 = vrot.slane %v1410, 2
        %v1413 = vshll.u32 %v1199, 16
        %v1415 = vrot.slane %v1413, 3
        %v1416 = vor.u32 %v1412, %v1415
        %v1417 = vsel %vm546, %v1408, %v1416
        %v1537 = vunpack.c.l.b16 %v1200
        %v1538 = vunpack.c.l.b16 %v1201
        %v1539 = vunpack.c.l.b16 %v1202
        %v1540 = vunpack.c.l.b16 %v1203
        %v1541 = vunpack.c.l.b16 %v1204
        %v1542 = vunpack.c.l.b16 %v1205
        %v1543 = vunpack.c.l.b16 %v1206
        %v1544 = vunpack.c.l.b16 %v1207
        %v1545 = vunpack.c.l.b16 %v1208
        %v1546 = vunpack.c.l.b16 %v1209
        %v1547 = vunpack.c.l.b16 %v1210
        %v1548 = vunpack.c.l.b16 %v1211
        %v1549 = vunpack.c.l.b16 %v1212
        %v1550 = vunpack.c.l.b16 %v1213
        %v1551 = vunpack.c.l.b16 %v1214
        %v1552 = vunpack.c.l.b16 %v1215
        %v1553 = vunpack.c.l.b16 %v1216
        %v1554 = vunpack.c.l.b16 %v1217
        %v1555 = vunpack.c.l.b16 %v1218
        %v1556 = vunpack.c.l.b16 %v1219
        %v1557 = vunpack.c.l.b16 %v1220
        %v1558 = vunpack.c.l.b16 %v1221
        %v1559 = vunpack.c.l.b16 %v1222
        %v1560 = vunpack.c.l.b16 %v1223
        %v1561 = vunpack.c.l.b16 %v1224
        %v1562 = vunpack.c.l.b16 %v1225
        %v1563 = vunpack.c.l.b16 %v1226
        %v1564 = vunpack.c.l.b16 %v1227
        %v1565 = vunpack.c.l.b16 %v1228
        %v1566 = vunpack.c.l.b16 %v1229
        %v1567 = vunpack.c.l.b16 %v1230
        %v1568 = vunpack.c.l.b16 %v1231
        %v1569 = vunpack.c.l.b16 %v1232
        %v1570 = vunpack.c.l.b16 %v1233
        %v1571 = vunpack.c.l.b16 %v1234
        %v1572 = vunpack.c.l.b16 %v1235
        %v1573 = vunpack.c.l.b16 %v1236
        %v1574 = vunpack.c.l.b16 %v1237
        %v1575 = vunpack.c.l.b16 %v1238
        %v1576 = vunpack.c.l.b16 %v1239
        %v1577 = vunpack.c.l.b16 %v1240
        %v1578 = vunpack.c.l.b16 %v1241
        %v1579 = vunpack.c.l.b16 %v1242
        %v1580 = vunpack.c.l.b16 %v1243
        %v1581 = vunpack.c.l.b16 %v1244
        %v1582 = vunpack.c.l.b16 %v1245
        %v1583 = vunpack.c.l.b16 %v1246
        %v1584 = vunpack.c.l.b16 %v1247
        %v1585 = vunpack.c.l.b16 %v1248
        %v1586 = vunpack.c.l.b16 %v1249
        %v1587 = vunpack.c.l.b16 %v1250
        %v1588 = vunpack.c.l.b16 %v1251
        %v1589 = vunpack.c.l.b16 %v1252
        %v1590 = vunpack.c.l.b16 %v1253
        %v1591 = vunpack.c.l.b16 %v1254
        %v1592 = vunpack.c.l.b16 %v1255
        %v1593 = vunpack.c.l.b16 %v1256
        %v1594 = vunpack.c.l.b16 %v1257
        %v1595 = vunpack.c.l.b16 %v1258
        %v1596 = vunpack.c.l.b16 %v1259
        %v1597 = vunpack.c.l.b16 %v1260
        %v1598 = vunpack.c.l.b16 %v1261
        %v1599 = vunpack.c.l.b16 %v1262
        %v1600 = vunpack.c.l.b16 %v1263
        %v1601 = vunpack.c.l.b16 %v1264
        %v1602 = vunpack.c.l.b16 %v1265
        %v1603 = vunpack.c.l.b16 %v1266
        %v1604 = vunpack.c.l.b16 %v1267
        %v1605 = vunpack.c.l.b16 %v1268
        %v1606 = vunpack.c.l.b16 %v1269
        %v1607 = vunpack.c.l.b16 %v1270
        %v1608 = vunpack.c.l.b16 %v1271
        %v1609 = vunpack.c.l.b16 %v1272
        %v1610 = vunpack.c.l.b16 %v1273
        %v1611 = vunpack.c.l.b16 %v1274
        %v1612 = vunpack.c.l.b16 %v1275
        %v1613 = vunpack.c.l.b16 %v1276
        %v1614 = vunpack.c.l.b16 %v1277
        %v1615 = vunpack.c.l.b16 %v1278
        %v1616 = vunpack.c.l.b16 %v1279
        %v1617 = vunpack.c.l.b16 %v1280
        %v1618 = vunpack.c.l.b16 %v1281
        %v1619 = vunpack.c.l.b16 %v1282
        %v1620 = vunpack.c.l.b16 %v1283
        %v1621 = vunpack.c.l.b16 %v1284
        %v1622 = vunpack.c.l.b16 %v1285
        %v1623 = vunpack.c.l.b16 %v1286
        %v1624 = vunpack.c.l.b16 %v1287
        %v1625 = vunpack.c.l.b16 %v1288
        %v1626 = vunpack.c.l.b16 %v1289
        %v1627 = vunpack.c.l.b16 %v1290
        %v1628 = vunpack.c.l.b16 %v1291
        %v1629 = vunpack.c.l.b16 %v1292
        %v1630 = vunpack.c.l.b16 %v1293
        %v1631 = vunpack.c.l.b16 %v1294
        %v1632 = vunpack.c.l.b16 %v1295
        %v1633 = vunpack.c.l.b16 %v1296
        %v1634 = vunpack.c.l.b16 %v1297
        %v1635 = vunpack.c.l.b16 %v1298
        %v1636 = vunpack.c.l.b16 %v1299
        %v1637 = vunpack.c.l.b16 %v1300
        %v1638 = vunpack.c.l.b16 %v1301
        %v1639 = vunpack.c.l.b16 %v1302
        %v1640 = vunpack.c.l.b16 %v1303
        %v1641 = vunpack.c.l.b16 %v1304
        %v1642 = vunpack.c.l.b16 %v1305
        %v1643 = vunpack.c.l.b16 %v1306
        %v1644 = vunpack.c.l.b16 %v1307
        %v1645 = vunpack.c.l.b16 %v1308
        %v1646 = vunpack.c.l.b16 %v1309
        %v1647 = vunpack.c.l.b16 %v1310
        %v1648 = vunpack.c.l.b16 %v1311
        %v1649 = vpack.c.b16 %v1538, %v1537
        %v1650 = vpack.c.b16 %v1540, %v1539
        %v1651 = vpack.c.b16 %v1542, %v1541
        %v1652 = vpack.c.b16 %v1544, %v1543
        %v1653 = vpack.c.b16 %v1546, %v1545
        %v1654 = vpack.c.b16 %v1548, %v1547
        %v1655 = vpack.c.b16 %v1550, %v1549
        %v1656 = vpack.c.b16 %v1552, %v1551
        %v1657 = vpack.c.b16 %v1554, %v1553
        %v1658 = vpack.c.b16 %v1556, %v1555
        %v1659 = vpack.c.b16 %v1558, %v1557
        %v1660 = vpack.c.b16 %v1560, %v1559
        %v1661 = vpack.c.b16 %v1562, %v1561
        %v1662 = vpack.c.b16 %v1564, %v1563
        %v1663 = vpack.c.b16 %v1566, %v1565
        %v1664 = vpack.c.b16 %v1568, %v1567
        %v1665 = vpack.c.b16 %v1570, %v1569
        %v1666 = vpack.c.b16 %v1572, %v1571
        %v1667 = vpack.c.b16 %v1574, %v1573
        %v1668 = vpack.c.b16 %v1576, %v1575
        %v1669 = vpack.c.b16 %v1578, %v1577
        %v1670 = vpack.c.b16 %v1580, %v1579
        %v1671 = vpack.c.b16 %v1582, %v1581
        %v1672 = vpack.c.b16 %v1584, %v1583
        %v1673 = vpack.c.b16 %v1586, %v1585
        %v1674 = vpack.c.b16 %v1588, %v1587
        %v1675 = vpack.c.b16 %v1590, %v1589
        %v1676 = vpack.c.b16 %v1592, %v1591
        %v1677 = vpack.c.b16 %v1594, %v1593
        %v1678 = vpack.c.b16 %v1596, %v1595
        %v1679 = vpack.c.b16 %v1598, %v1597
        %v1680 = vpack.c.b16 %v1600, %v1599
        %v1681 = vpack.c.b16 %v1602, %v1601
        %v1682 = vpack.c.b16 %v1604, %v1603
        %v1683 = vpack.c.b16 %v1606, %v1605
        %v1684 = vpack.c.b16 %v1608, %v1607
        %v1685 = vpack.c.b16 %v1610, %v1609
        %v1686 = vpack.c.b16 %v1612, %v1611
        %v1687 = vpack.c.b16 %v1614, %v1613
        %v1688 = vpack.c.b16 %v1616, %v1615
        %v1689 = vpack.c.b16 %v1618, %v1617
        %v1690 = vpack.c.b16 %v1620, %v1619
        %v1691 = vpack.c.b16 %v1622, %v1621
        %v1692 = vpack.c.b16 %v1624, %v1623
        %v1693 = vpack.c.b16 %v1626, %v1625
        %v1694 = vpack.c.b16 %v1628, %v1627
        %v1695 = vpack.c.b16 %v1630, %v1629
        %v1696 = vpack.c.b16 %v1632, %v1631
        %v1697 = vpack.c.b16 %v1634, %v1633
        %v1698 = vpack.c.b16 %v1636, %v1635
        %v1699 = vpack.c.b16 %v1638, %v1637
        %v1700 = vpack.c.b16 %v1640, %v1639
        %v1701 = vpack.c.b16 %v1642, %v1641
        %v1702 = vpack.c.b16 %v1644, %v1643
        %v1703 = vpack.c.b16 %v1646, %v1645
        %v1704 = vpack.c.b16 %v1648, %v1647
        %1761 = vmatpush.bf16.msra.mxu0 %v1656
        %1762 = vmatpush.bf16.msra.mxu0 %v1655
        %1763 = vmatpush.bf16.msra.mxu0 %v1654
        %1764 = vmatpush.bf16.msra.mxu0 %v1653
        %1765 = vmatpush.bf16.msra.mxu0 %v1652
        %1766 = vmatpush.bf16.msra.mxu0 %v1651
        %1767 = vmatpush.bf16.msra.mxu0 %v1650
        %1768 = vmatpush.bf16.msra.mxu0 %v1649
        %1769 = vmatmul.bf16.gmra.mxu0 %v1323
        %v1770 = vpop.f32.mrf.mxu0
        %v1771 = vadd.f32 0.0, %v1770
        %v1772 = vpop.f32.mrf.mxu0
        %v1773 = vadd.f32 0.0, %v1772
        %1774 = vdwg.mxu0
        %1775 = vmatpush.bf16.msra.mxu0 %v1664
        %1776 = vmatpush.bf16.msra.mxu0 %v1663
        %1777 = vmatpush.bf16.msra.mxu0 %v1662
        %1778 = vmatpush.bf16.msra.mxu0 %v1661
        %1779 = vmatpush.bf16.msra.mxu0 %v1660
        %1780 = vmatpush.bf16.msra.mxu0 %v1659
        %1781 = vmatpush.bf16.msra.mxu0 %v1658
        %1782 = vmatpush.bf16.msra.mxu0 %v1657
        %1783 = vmatmul.bf16.gmra.mxu0 %v1340
        %v1784 = vpop.f32.mrf.mxu0
        %v1785 = vadd.f32 %v1771, %v1784
        %v1786 = vpop.f32.mrf.mxu0
        %v1787 = vadd.f32 %v1773, %v1786
        %1788 = vdwg.mxu0
        %1789 = vmatpush.bf16.msra.mxu0 %v1672
        %1790 = vmatpush.bf16.msra.mxu0 %v1671
        %1791 = vmatpush.bf16.msra.mxu0 %v1670
        %1792 = vmatpush.bf16.msra.mxu0 %v1669
        %1793 = vmatpush.bf16.msra.mxu0 %v1668
        %1794 = vmatpush.bf16.msra.mxu0 %v1667
        %1795 = vmatpush.bf16.msra.mxu0 %v1666
        %1796 = vmatpush.bf16.msra.mxu0 %v1665
        %1797 = vmatmul.bf16.gmra.mxu0 %v1357
        %v1798 = vpop.f32.mrf.mxu0
        %v1799 = vadd.f32 %v1785, %v1798
        %v1800 = vpop.f32.mrf.mxu0
        %v1801 = vadd.f32 %v1787, %v1800
        %1802 = vdwg.mxu0
        %1803 = vmatpush.bf16.msra.mxu0 %v1680
        %1804 = vmatpush.bf16.msra.mxu0 %v1679
        %1805 = vmatpush.bf16.msra.mxu0 %v1678
        %1806 = vmatpush.bf16.msra.mxu0 %v1677
        %1807 = vmatpush.bf16.msra.mxu0 %v1676
        %1808 = vmatpush.bf16.msra.mxu0 %v1675
        %1809 = vmatpush.bf16.msra.mxu0 %v1674
        %1810 = vmatpush.bf16.msra.mxu0 %v1673
        %1811 = vmatmul.bf16.gmra.mxu0 %v1366
        %v1812 = vpop.f32.mrf.mxu0
        %v1813 = vadd.f32 %v1799, %v1812
        %v1814 = vpop.f32.mrf.mxu0
        %v1815 = vadd.f32 %v1801, %v1814
        %1816 = vdwg.mxu0
        %1817 = vmatpush.bf16.msra.mxu0 %v1688
        %1818 = vmatpush.bf16.msra.mxu0 %v1687
        %1819 = vmatpush.bf16.msra.mxu0 %v1686
        %1820 = vmatpush.bf16.msra.mxu0 %v1685
        %1821 = vmatpush.bf16.msra.mxu0 %v1684
        %1822 = vmatpush.bf16.msra.mxu0 %v1683
        %1823 = vmatpush.bf16.msra.mxu0 %v1682
        %1824 = vmatpush.bf16.msra.mxu0 %v1681
        %1825 = vmatmul.bf16.gmra.mxu0 %v1383
        %v1826 = vpop.f32.mrf.mxu0
        %v1827 = vadd.f32 %v1813, %v1826
        %v1828 = vpop.f32.mrf.mxu0
        %v1829 = vadd.f32 %v1815, %v1828
        %1830 = vdwg.mxu0
        %1831 = vmatpush.bf16.msra.mxu0 %v1696
        %1832 = vmatpush.bf16.msra.mxu0 %v1695
        %1833 = vmatpush.bf16.msra.mxu0 %v1694
        %1834 = vmatpush.bf16.msra.mxu0 %v1693
        %1835 = vmatpush.bf16.msra.mxu0 %v1692
        %1836 = vmatpush.bf16.msra.mxu0 %v1691
        %1837 = vmatpush.bf16.msra.mxu0 %v1690
        %1838 = vmatpush.bf16.msra.mxu0 %v1689
        %1839 = vmatmul.bf16.gmra.mxu0 %v1400
        %v1840 = vpop.f32.mrf.mxu0
        %v1841 = vadd.f32 %v1827, %v1840
        %v1842 = vpop.f32.mrf.mxu0
        %v1843 = vadd.f32 %v1829, %v1842
        %1844 = vdwg.mxu0
        %1845 = vmatpush.bf16.msra.mxu0 %v1704
        %1846 = vmatpush.bf16.msra.mxu0 %v1703
        %1847 = vmatpush.bf16.msra.mxu0 %v1702
        %1848 = vmatpush.bf16.msra.mxu0 %v1701
        %1849 = vmatpush.bf16.msra.mxu0 %v1700
        %1850 = vmatpush.bf16.msra.mxu0 %v1699
        %1851 = vmatpush.bf16.msra.mxu0 %v1698
        %1852 = vmatpush.bf16.msra.mxu0 %v1697
        %1853 = vmatmul.bf16.gmra.mxu0 %v1417
        %v1854 = vpop.f32.mrf.mxu0
        %v1855 = vadd.f32 %v1841, %v1854
        %v1856 = vpop.f32.mrf.mxu0
        %v1857 = vadd.f32 %v1843, %v1856
        %1858 = vdwg.mxu0
        %v1859 = vld [vmem:[%s290] sm:$0xf]
        %v1860 = vld [vmem:[%s290 + $0x4] sm:$0xf]
        %v1861 = vunpack.c.l.bf16 %v1859
        %v1862 = vunpack.c.l.bf16 %v1860
        %v1863 = vld [vmem:[%s5] sm:$0x1]
        %v1865 = vperm.slane %v1863, 0
        %v1867 = vmul.f32 %v1855, %v1865
        %v1868 = vmul.f32 %v1857, %v1865
        %v1869 = vld [vmem:[%s6] sm:$0x1]
        %v1871 = vperm.slane %v1869, 0
        %v1873 = vadd.f32 %v1867, %v1871
        %v1874 = vadd.f32 %v1868, %v1871
        %v1875 = vadd.f32 %v1873, %v1861
        %v1876 = vadd.f32 %v1874, %v1862
        %v1877 = vmax.f32 %v1875, 0.0
        %v1878 = vmax.f32 %v1876, 0.0
        %1879 = vst [vmem:[%s331] sm:$0xff] %v1877
        %1880 = vst [vmem:[%s331 + $0x8] sm:$0xff] %v1878
        %s1881 = sand.u32 %s185, 1
        %s1882 = scalar_lea.sflag [#allocation6], %s1881
        %s1883 = sand.u32 %s185, 1
        %s1884 = smul.addr %s1883, 16
        %s1885 = scalar_lea.vmem [#allocation10], %s1884
        // Predicated region
        $region61: #{tpu_custom_call.1} parent=47 // pred_check
          %p1886 = pneg %p195
        $region62: #{tpu_custom_call.1} parent=47 // pred_check_branch
          %1888 = sbr.rel (%p1886) target = $region64
        $region63: #{tpu_custom_call.1} parent=47 // pred_region
          %1890 = vsyncadd %s1882, 0
          %s1891 = smul.addr %s25, 2
          %s1892 = smul.addr %s1891, 8
          %s1893 = scalar_lea.hbm %s7, %s1892
          %s1894 = sshll.u32 %s1885, 4
          %s1895 = int_to_ptr.vmem [resolvable:$true] %s1894
          %s1896 = sshll.u32 %s1893, 4
          %s1897 = int_to_ptr.hbm [resolvable:$true] %s1896
          %1902 = dma.vmem_to_hbm [thread:$0]  %s1895, 256, %s1897, %s1882, 128, 128, 8
        $region64: #{tpu_custom_call.1} parent=47 // pred_fallthru
          _
      $region48: #{tpu_custom_call.1} parent=5 // pred_fallthru
        _
      %p1903 = scmp.le.s32.totalorder 2, %s20
      // Predicated region
      $region65: #{tpu_custom_call.1} parent=5 // pred_check
        %p1904 = pneg %p1903
      $region66: #{tpu_custom_call.1} parent=5 // pred_check_branch
        %1906 = sbr.rel (%p1904) target = $region68
      $region67: #{tpu_custom_call.1} parent=5 // pred_region
        %s1907 = ssub.s32 %s20, 2
        // Predicated region
        $region69: #{tpu_custom_call.1} parent=67 // pred_check
          %p1908 = pneg %p201
        $region70: #{tpu_custom_call.1} parent=67 // pred_check_branch
          %1910 = sbr.rel (%p1908) target = $region72
        $region71: #{tpu_custom_call.1} parent=67 // pred_region
          %s1911 = sand.u32 %s186, 1
          %s1912 = scalar_lea.sflag [#allocation6], %s1911
          %s1913 = sand.u32 %s186, 1
          %s1914 = smul.addr %s1913, 16
          %s1915 = scalar_lea.vmem [#allocation10], %s1914
          %1917 = dma.done %s1912, 256
        $region72: #{tpu_custom_call.1} parent=67 // pred_fallthru
          _
      $region68: #{tpu_custom_call.1} parent=5 // pred_fallthru
        _
    $region6: #{tpu_custom_call.1} parent=1 // loop_footer
      %s24 = sadd.s32 1, %s20
    $region7: #{tpu_custom_call.1} parent=1 // loop_footer_branch
      %19 = sbr.rel target = $region3
    $region8: #{tpu_custom_call.1} parent=1 // loop_exit
      _
    %1918 = vsyncpa [#allocation5], 1
    %s1919 = scalar_lea.sflag [#allocation5], 1
    %1920 = vsyncpa %s1919, 1
    %1921 = vsyncpa [#allocation8], 1
    %1922 = vsyncpa [#allocation6], 1
    %s1923 = scalar_lea.sflag [#allocation6], 1
    %1924 = vsyncpa %s1923, 1

</llo_original>
